<compile_context>
chip_gen: v5e
topology: v5e:2x2
jax: 0.10.0
libtpu: 0.0.40
codegen_flags: <defaults>
</compile_context>

<pallas_src>
import jax
import jax.numpy as jnp
from jax.experimental import pallas as pl
from jax.experimental.pallas import tpu as pltpu

# ---- module constants (from sparse_covariance/train.py) ----
d = 5
hidden_size = 100
layers = 50
n = 200
indices = [(0, 3), (1, 2), (3, 4), (2, 4)]
num_cov = d + len(indices)        # 9
v_size = 50
din = d * d + v_size              # 75
D2 = d * d                        # 25

# ---- padded (lane-dense) layout ----
PAD = 128                         # one full vreg lane width everywhere
Y_OFF = v_size                    # y occupies vy[:, 50:75); v occupies [0:50)
CHUNK = 10                        # layers per grid step (50 / 10 = 5 chunks)


# ----------------------------------------------------------------------------
# Kernel: CHUNK recurrent layers per grid step; carry lives in the output block
# ----------------------------------------------------------------------------
def _net_kernel(vy0_ref, y0_ref, w1_ref, b1_ref, w2_ref, b2_ref, out_ref):
    c = pl.program_id(1)          # layer-chunk index (innermost, "arbitrary")

    # Initialize the VMEM-resident (B_blk, 128) carry from the input slab at
    # the first layer chunk of each batch block.
    @pl.when(c == 0)
    def _():
        out_ref[...] = vy0_ref[...]

    vy = out_ref[...]                                    # (B_blk, PAD) f32 carry

    # Layer-0-only constants (used once per chunk, at static l == 0).
    col = jax.lax.broadcasted_iota(jnp.int32, (1, PAD), 1)
    mask_v = (col < v_size).astype(jnp.float32)          # 1.0 on v lanes [0, 50)
    y0 = y0_ref[...]                                     # alpha0@covs + eye on y lanes
    first = (c == 0).astype(jnp.float32)                 # scalar gate for global layer 0

    for l in range(CHUNK):                               # static unroll (10 layers)
        h = jnp.maximum(
            jnp.dot(vy.astype(jnp.bfloat16), w1_ref[l],
                    preferred_element_type=jnp.float32) + b1_ref[l], 0.0)
        o = jnp.dot(h.astype(jnp.bfloat16), w2_ref[l],
                    preferred_element_type=jnp.float32) + b2_ref[l]
        # o lanes: [0,50) = dv, [50,75) = dalpha @ covs, [75,128) exactly 0
        upd = vy + 0.1 * o
        if l == 0:
            # Global layer 0 only (first chunk): replace the gram lanes with
            # alpha0@covs + eye, i.e.  mask_v*vy + y0 + 0.1*o
            upd = upd + first * (y0 - (1.0 - mask_v) * vy)
        vy = upd

    out_ref[...] = vy


# ----------------------------------------------------------------------------
# jit wrapper: gram prologue in XLA, then the layer-chunked pallas_call
# ----------------------------------------------------------------------------
@jax.jit
def net_forward(x, kp):
    B = x.shape[0]
    # Gram prologue (x^T x / n) in XLA per the perf review: the lane-sparse
    # (B, n, 5) input never enters the kernel; pack the result into the
    # lane-dense (B, 128) initial carry slab (v lanes 0, y lanes = gram).
    gram = (jnp.einsum('bni,bnj->bij', x, x) / n).reshape(B, D2)
    vy0 = jnp.zeros((B, PAD), jnp.float32).at[:, Y_OFF:Y_OFF + D2].set(gram)

    nb = 2 if (B % 16 == 0) else 1          # batch blocks (v7x: one per TensorCore)
    b_blk = B // nb
    n_chunks = layers // CHUNK

    out = pl.pallas_call(
        _net_kernel,
        out_shape=jax.ShapeDtypeStruct((B, PAD), jnp.float32),
        grid_spec=pltpu.PrefetchScalarGridSpec(
            num_scalar_prefetch=0,
            grid=(nb, n_chunks),
            in_specs=[
                pl.BlockSpec((b_blk, PAD), lambda b, c: (b, 0)),          # vy0 slab
                pl.BlockSpec((1, PAD), lambda b, c: (0, 0)),              # y0 const
                pl.BlockSpec((CHUNK, PAD, PAD), lambda b, c: (c, 0, 0)),  # w1 (bf16)
                pl.BlockSpec((CHUNK, 1, PAD), lambda b, c: (c, 0, 0)),    # b1 (f32)
                pl.BlockSpec((CHUNK, PAD, PAD), lambda b, c: (c, 0, 0)),  # w2 (bf16)
                pl.BlockSpec((CHUNK, 1, PAD), lambda b, c: (c, 0, 0)),    # b2 (f32)
            ],
            out_specs=pl.BlockSpec((b_blk, PAD), lambda b, c: (b, 0)),
        ),
        compiler_params=pltpu.CompilerParams(
            dimension_semantics=("parallel", "arbitrary")),
    )(vy0, kp["y0"], kp["w1p"], kp["b1p"], kp["w2p"], kp["b2p"])
    return out[:, Y_OFF:Y_OFF + D2]                      # final y, shape (B, d*d)


# ----------------------------------------------------------------------------
# Deterministic parameter construction (synthetic; no checkpoint load).
# ----------------------------------------------------------------------------
def init_params(key):
    ks = jax.random.split(key, 6)
    w1 = jax.random.normal(ks[0], (layers, din, hidden_size), jnp.float32) * 0.05
    b1 = jax.random.normal(ks[1], (layers, 1, hidden_size), jnp.float32) * 0.01
    w2v = jax.random.normal(ks[2], (layers, hidden_size, v_size), jnp.float32) * 0.05
    b2v = jax.random.normal(ks[3], (layers, 1, v_size), jnp.float32) * 0.01
    w2a = jax.random.normal(ks[4], (layers, hidden_size, num_cov), jnp.float32) * 0.05
    b2a = jax.random.normal(ks[5], (layers, 1, num_cov), jnp.float32) * 0.01

    # covs_torch is an undefined/empty global in the original script; synthesize
    # the standard sparse-covariance basis deterministically: diagonal E_ii plus
    # symmetric (E_ij + E_ji) for the listed index pairs, each flattened.
    basis = []
    for i in range(d):
        basis.append(jnp.zeros((d, d), jnp.float32).at[i, i].set(1.0).reshape(-1))
    for (i, j) in indices:
        basis.append(jnp.zeros((d, d), jnp.float32)
                     .at[i, j].set(1.0).at[j, i].set(1.0).reshape(-1))
    covs = jnp.stack(basis, axis=0)                      # (num_cov, d*d)

    return dict(w1=w1, b1=b1, w2v=w2v, b2v=b2v, w2a=w2a, b2a=b2a, covs=covs)


def pack_params(p):
    """Pad / merge / fold the logical parameters into the kernel layout."""
    # fc1: rows [0,50) multiply v, rows [50,75) multiply y (torch cat([v,y]) order)
    w1p = (jnp.zeros((layers, PAD, PAD), jnp.float32)
           .at[:, :din, :hidden_size].set(p["w1"])).astype(jnp.bfloat16)
    b1p = jnp.zeros((layers, 1, PAD), jnp.float32).at[:, :, :hidden_size].set(p["b1"])

    # fc2 merged + covs folded:  cols [0,50) = w2v (dv),
    #                            cols [50,75) = w2a @ covs (dy), rest exactly 0
    w2y = jnp.einsum('lhc,cy->lhy', p["w2a"], p["covs"])         # (layers, hidden, 25)
    b2y = jnp.einsum('lbc,cy->lby', p["b2a"], p["covs"])         # (layers, 1, 25)
    w2p = jnp.zeros((layers, PAD, PAD), jnp.float32)
    w2p = w2p.at[:, :hidden_size, :v_size].set(p["w2v"])
    w2p = w2p.at[:, :hidden_size, Y_OFF:Y_OFF + D2].set(w2y)
    w2p = w2p.astype(jnp.bfloat16)
    b2p = jnp.zeros((layers, 1, PAD), jnp.float32)
    b2p = b2p.at[:, :, :v_size].set(p["b2v"])
    b2p = b2p.at[:, :, Y_OFF:Y_OFF + D2].set(b2y)

    # One-time constant added at global layer 0:  alpha0 @ covs + eye on y lanes
    y0_flat = 0.5 * jnp.sum(p["covs"], axis=0) + jnp.eye(d, dtype=jnp.float32).reshape(-1)
    y0 = jnp.zeros((1, PAD), jnp.float32).at[0, Y_OFF:Y_OFF + D2].set(y0_flat)

    return dict(w1p=w1p, b1p=b1p, w2p=w2p, b2p=b2p, y0=y0)


# Pure-JAX reference (mirrors the PyTorch forward) for correctness checking.
def net_forward_ref(x, p):
    B = x.shape[0]
    y = (jnp.einsum('bni,bnj->bij', x, x) / n).reshape(B, D2)
    alpha = jnp.full((B, num_cov), 0.5, jnp.float32)
    v = jnp.zeros((B, v_size), jnp.float32)
    eye_flat = jnp.eye(d, dtype=jnp.float32).reshape(1, D2)
    for i in range(layers):
        inp = jnp.concatenate([v, y], axis=1)
        h = jax.nn.relu(inp @ p["w1"][i] + p["b1"][i])
        dv = h @ p["w2v"][i] + p["b2v"][i]
        da = h @ p["w2a"][i] + p["b2a"][i]
        alpha = alpha + 0.1 * da
        v = v + 0.1 * dv
        y = alpha @ p["covs"] + eye_flat
    return y


if __name__ == "__main__":
    key = jax.random.PRNGKey(0)
    kx, kp_key = jax.random.split(key)
    B = 64                                   # kernel is batch-generic; B amortizes weight streaming
    x = jax.random.normal(kx, (B, n, d), jnp.float32)

    params = init_params(kp_key)
    kparams = pack_params(params)

    out = jax.block_until_ready(net_forward(x, kparams))
    assert out.shape == (B, D2) and out.dtype == jnp.float32

    ref = net_forward_ref(x, params)
    err = float(jnp.max(jnp.abs(out - ref)))
    # bf16 weight storage + the offline covs fold reorder rounding slightly vs
    # the f32-stored reference (which itself uses default bf16 MXU precision);
    # values are O(1), so 2e-2 comfortably covers 50-layer drift while still
    # catching any real layout/fold bug (those produce O(0.1-1) errors).
    assert err < 2e-2, f"max abs err {err}"

    print("KERNEL_OK")
</pallas_src>

<mosaic_0001>
module attributes {stable_mosaic.version = 11 : i64} {
  func.func @_net_kernel(%arg0: i32, %arg1: i32, %arg2: memref<32x128xf32, #tpu.memory_space<vmem>>, %arg3: memref<1x128xf32, #tpu.memory_space<vmem>>, %arg4: memref<10x128x128xbf16, #tpu.memory_space<vmem>>, %arg5: memref<10x1x128xf32, #tpu.memory_space<vmem>>, %arg6: memref<10x128x128xbf16, #tpu.memory_space<vmem>>, %arg7: memref<10x1x128xf32, #tpu.memory_space<vmem>>, %arg8: memref<32x128xf32, #tpu.memory_space<vmem>>) attributes {dimension_semantics = [#tpu.dimension_semantics<parallel>, #tpu.dimension_semantics<arbitrary>], iteration_bounds = array<i64: 2, 5>, scalar_prefetch = 0 : i64, scratch_operands = 0 : i64, tpu.core_type = #tpu.core_type<tc>, window_params = [{transform_indices = @transform_0, window_bounds = array<i64: 32, 128>}, {pipeline_mode = #tpu.pipeline_mode<synchronous>, transform_indices = @transform_1, window_bounds = array<i64: 1, 128>}, {transform_indices = @transform_2, window_bounds = array<i64: 10, 128, 128>}, {transform_indices = @transform_3, window_bounds = array<i64: 10, 1, 128>}, {transform_indices = @transform_4, window_bounds = array<i64: 10, 128, 128>}, {transform_indices = @transform_5, window_bounds = array<i64: 10, 1, 128>}, {transform_indices = @transform_6, window_bounds = array<i64: 32, 128>}]} {
    %c0_i32 = arith.constant 0 : i32
    %0 = arith.cmpi eq, %arg1, %c0_i32 : i32
    %1 = arith.extui %0 : i1 to i32
    %c0_i32_0 = arith.constant 0 : i32
    %2 = arith.cmpi ne, %1, %c0_i32_0 : i32
    scf.if %2 {
      %c0_158 = arith.constant 0 : index
      %c0_159 = arith.constant 0 : index
      %233 = vector.load %arg2[%c0_158, %c0_159] : memref<32x128xf32, #tpu.memory_space<vmem>>, vector<32x128xf32>
      %c0_160 = arith.constant 0 : index
      %c0_161 = arith.constant 0 : index
      %234 = vector.load %arg8[%c0_160, %c0_161] : memref<32x128xf32, #tpu.memory_space<vmem>>, vector<32x128xf32>
      tpu.vector_store %arg8[%c0_160, %c0_161], %233 {strides = array<i32>} : memref<32x128xf32, #tpu.memory_space<vmem>>, vector<32x128xf32>,
    } else {
    }
    %c0 = arith.constant 0 : index
    %c0_1 = arith.constant 0 : index
    %3 = vector.load %arg8[%c0, %c0_1] : memref<32x128xf32, #tpu.memory_space<vmem>>, vector<32x128xf32>
    %4 = tpu.iota {dimensions = array<i32: 1>} : vector<1x128xi32>
    %c50_i32 = arith.constant 50 : i32
    %5 = vector.broadcast %c50_i32 : i32 to vector<1x128xi32>
    %6 = arith.cmpi slt, %4, %5 : vector<1x128xi32>
    %7 = arith.extui %6 : vector<1x128xi1> to vector<1x128xi32>
    %8 = arith.sitofp %7 : vector<1x128xi32> to vector<1x128xf32>
    %c0_2 = arith.constant 0 : index
    %c0_3 = arith.constant 0 : index
    %9 = vector.load %arg3[%c0_2, %c0_3] : memref<1x128xf32, #tpu.memory_space<vmem>>, vector<1x128xf32>
    %c0_i32_4 = arith.constant 0 : i32
    %10 = arith.cmpi eq, %arg1, %c0_i32_4 : i32
    %11 = arith.extui %10 : i1 to i32
    %12 = arith.sitofp %11 : i32 to f32
    %13 = arith.truncf %3 : vector<32x128xf32> to vector<32x128xbf16>
    %c0_5 = arith.constant 0 : index
    %c0_6 = arith.constant 0 : index
    %c0_7 = arith.constant 0 : index
    %14 = vector.load %arg4[%c0_5, %c0_6, %c0_7] : memref<10x128x128xbf16, #tpu.memory_space<vmem>>, vector<1x128x128xbf16>
    %15 = vector.shape_cast %14 : vector<1x128x128xbf16> to vector<128x128xbf16>
    %cst = arith.constant dense<0.000000e+00> : vector<32x128xf32>
    %16 = tpu.matmul %13, %15, %cst {dimension_numbers = #tpu.dot_dimension_numbers<[1], [0], [0], [1], [0, 0, 1, 1], [], []>} : vector<32x128xbf16>, vector<128x128xbf16>, vector<32x128xf32> -> vector<32x128xf32>
    %c0_8 = arith.constant 0 : index
    %c0_9 = arith.constant 0 : index
    %c0_10 = arith.constant 0 : index
    %17 = vector.load %arg5[%c0_8, %c0_9, %c0_10] : memref<10x1x128xf32, #tpu.memory_space<vmem>>, vector<1x1x128xf32>
    %18 = vector.shape_cast %17 : vector<1x1x128xf32> to vector<1x128xf32>
    %19 = vector.broadcast %18 : vector<1x128xf32> to vector<32x128xf32>
    %20 = arith.addf %16, %19 : vector<32x128xf32>
    %cst_11 = arith.constant 0.000000e+00 : f32
    %21 = vector.broadcast %cst_11 : f32 to vector<32x128xf32>
    %22 = arith.maximumf %20, %21 : vector<32x128xf32>
    %23 = arith.truncf %22 : vector<32x128xf32> to vector<32x128xbf16>
    %c0_12 = arith.constant 0 : index
    %c0_13 = arith.constant 0 : index
    %c0_14 = arith.constant 0 : index
    %24 = vector.load %arg6[%c0_12, %c0_13, %c0_14] : memref<10x128x128xbf16, #tpu.memory_space<vmem>>, vector<1x128x128xbf16>
    %25 = vector.shape_cast %24 : vector<1x128x128xbf16> to vector<128x128xbf16>
    %cst_15 = arith.constant dense<0.000000e+00> : vector<32x128xf32>
    %26 = tpu.matmul %23, %25, %cst_15 {dimension_numbers = #tpu.dot_dimension_numbers<[1], [0], [0], [1], [0, 0, 1, 1], [], []>} : vector<32x128xbf16>, vector<128x128xbf16>, vector<32x128xf32> -> vector<32x128xf32>
    %c0_16 = arith.constant 0 : index
    %c0_17 = arith.constant 0 : index
    %c0_18 = arith.constant 0 : index
    %27 = vector.load %arg7[%c0_16, %c0_17, %c0_18] : memref<10x1x128xf32, #tpu.memory_space<vmem>>, vector<1x1x128xf32>
    %28 = vector.shape_cast %27 : vector<1x1x128xf32> to vector<1x128xf32>
    %29 = vector.broadcast %28 : vector<1x128xf32> to vector<32x128xf32>
    %30 = arith.addf %26, %29 : vector<32x128xf32>
    %cst_19 = arith.constant 1.000000e-01 : f32
    %31 = vector.broadcast %cst_19 : f32 to vector<32x128xf32>
    %32 = arith.mulf %31, %30 : vector<32x128xf32>
    %33 = arith.addf %3, %32 : vector<32x128xf32>
    %cst_20 = arith.constant 1.000000e+00 : f32
    %34 = vector.broadcast %cst_20 : f32 to vector<1x128xf32>
    %35 = arith.subf %34, %8 : vector<1x128xf32>
    %36 = vector.broadcast %35 : vector<1x128xf32> to vector<32x128xf32>
    %37 = arith.mulf %36, %3 : vector<32x128xf32>
    %38 = vector.broadcast %9 : vector<1x128xf32> to vector<32x128xf32>
    %39 = arith.subf %38, %37 : vector<32x128xf32>
    %40 = vector.broadcast %12 : f32 to vector<32x128xf32>
    %41 = arith.mulf %40, %39 : vector<32x128xf32>
    %42 = arith.addf %33, %41 : vector<32x128xf32>
    %43 = arith.truncf %42 : vector<32x128xf32> to vector<32x128xbf16>
    %c1 = arith.constant 1 : index
    %c0_21 = arith.constant 0 : index
    %c0_22 = arith.constant 0 : index
    %44 = vector.load %arg4[%c1, %c0_21, %c0_22] : memref<10x128x128xbf16, #tpu.memory_space<vmem>>, vector<1x128x128xbf16>
    %45 = vector.shape_cast %44 : vector<1x128x128xbf16> to vector<128x128xbf16>
    %cst_23 = arith.constant dense<0.000000e+00> : vector<32x128xf32>
    %46 = tpu.matmul %43, %45, %cst_23 {dimension_numbers = #tpu.dot_dimension_numbers<[1], [0], [0], [1], [0, 0, 1, 1], [], []>} : vector<32x128xbf16>, vector<128x128xbf16>, vector<32x128xf32> -> vector<32x128xf32>
    %c1_24 = arith.constant 1 : index
    %c0_25 = arith.constant 0 : index
    %c0_26 = arith.constant 0 : index
    %47 = vector.load %arg5[%c1_24, %c0_25, %c0_26] : memref<10x1x128xf32, #tpu.memory_space<vmem>>, vector<1x1x128xf32>
    %48 = vector.shape_cast %47 : vector<1x1x128xf32> to vector<1x128xf32>
    %49 = vector.broadcast %48 : vector<1x128xf32> to vector<32x128xf32>
    %50 = arith.addf %46, %49 : vector<32x128xf32>
    %cst_27 = arith.constant 0.000000e+00 : f32
    %51 = vector.broadcast %cst_27 : f32 to vector<32x128xf32>
    %52 = arith.maximumf %50, %51 : vector<32x128xf32>
    %53 = arith.truncf %52 : vector<32x128xf32> to vector<32x128xbf16>
    %c1_28 = arith.constant 1 : index
    %c0_29 = arith.constant 0 : index
    %c0_30 = arith.constant 0 : index
    %54 = vector.load %arg6[%c1_28, %c0_29, %c0_30] : memref<10x128x128xbf16, #tpu.memory_space<vmem>>, vector<1x128x128xbf16>
    %55 = vector.shape_cast %54 : vector<1x128x128xbf16> to vector<128x128xbf16>
    %cst_31 = arith.constant dense<0.000000e+00> : vector<32x128xf32>
    %56 = tpu.matmul %53, %55, %cst_31 {dimension_numbers = #tpu.dot_dimension_numbers<[1], [0], [0], [1], [0, 0, 1, 1], [], []>} : vector<32x128xbf16>, vector<128x128xbf16>, vector<32x128xf32> -> vector<32x128xf32>
    %c1_32 = arith.constant 1 : index
    %c0_33 = arith.constant 0 : index
    %c0_34 = arith.constant 0 : index
    %57 = vector.load %arg7[%c1_32, %c0_33, %c0_34] : memref<10x1x128xf32, #tpu.memory_space<vmem>>, vector<1x1x128xf32>
    %58 = vector.shape_cast %57 : vector<1x1x128xf32> to vector<1x128xf32>
    %59 = vector.broadcast %58 : vector<1x128xf32> to vector<32x128xf32>
    %60 = arith.addf %56, %59 : vector<32x128xf32>
    %cst_35 = arith.constant 1.000000e-01 : f32
    %61 = vector.broadcast %cst_35 : f32 to vector<32x128xf32>
    %62 = arith.mulf %61, %60 : vector<32x128xf32>
    %63 = arith.addf %42, %62 : vector<32x128xf32>
    %64 = arith.truncf %63 : vector<32x128xf32> to vector<32x128xbf16>
    %c2 = arith.constant 2 : index
    %c0_36 = arith.constant 0 : index
    %c0_37 = arith.constant 0 : index
    %65 = vector.load %arg4[%c2, %c0_36, %c0_37] : memref<10x128x128xbf16, #tpu.memory_space<vmem>>, vector<1x128x128xbf16>
    %66 = vector.shape_cast %65 : vector<1x128x128xbf16> to vector<128x128xbf16>
    %cst_38 = arith.constant dense<0.000000e+00> : vector<32x128xf32>
    %67 = tpu.matmul %64, %66, %cst_38 {dimension_numbers = #tpu.dot_dimension_numbers<[1], [0], [0], [1], [0, 0, 1, 1], [], []>} : vector<32x128xbf16>, vector<128x128xbf16>, vector<32x128xf32> -> vector<32x128xf32>
    %c2_39 = arith.constant 2 : index
    %c0_40 = arith.constant 0 : index
    %c0_41 = arith.constant 0 : index
    %68 = vector.load %arg5[%c2_39, %c0_40, %c0_41] : memref<10x1x128xf32, #tpu.memory_space<vmem>>, vector<1x1x128xf32>
    %69 = vector.shape_cast %68 : vector<1x1x128xf32> to vector<1x128xf32>
    %70 = vector.broadcast %69 : vector<1x128xf32> to vector<32x128xf32>
    %71 = arith.addf %67, %70 : vector<32x128xf32>
    %cst_42 = arith.constant 0.000000e+00 : f32
    %72 = vector.broadcast %cst_42 : f32 to vector<32x128xf32>
    %73 = arith.maximumf %71, %72 : vector<32x128xf32>
    %74 = arith.truncf %73 : vector<32x128xf32> to vector<32x128xbf16>
    %c2_43 = arith.constant 2 : index
    %c0_44 = arith.constant 0 : index
    %c0_45 = arith.constant 0 : index
    %75 = vector.load %arg6[%c2_43, %c0_44, %c0_45] : memref<10x128x128xbf16, #tpu.memory_space<vmem>>, vector<1x128x128xbf16>
    %76 = vector.shape_cast %75 : vector<1x128x128xbf16> to vector<128x128xbf16>
    %cst_46 = arith.constant dense<0.000000e+00> : vector<32x128xf32>
    %77 = tpu.matmul %74, %76, %cst_46 {dimension_numbers = #tpu.dot_dimension_numbers<[1], [0], [0], [1], [0, 0, 1, 1], [], []>} : vector<32x128xbf16>, vector<128x128xbf16>, vector<32x128xf32> -> vector<32x128xf32>
    %c2_47 = arith.constant 2 : index
    %c0_48 = arith.constant 0 : index
    %c0_49 = arith.constant 0 : index
    %78 = vector.load %arg7[%c2_47, %c0_48, %c0_49] : memref<10x1x128xf32, #tpu.memory_space<vmem>>, vector<1x1x128xf32>
    %79 = vector.shape_cast %78 : vector<1x1x128xf32> to vector<1x128xf32>
    %80 = vector.broadcast %79 : vector<1x128xf32> to vector<32x128xf32>
    %81 = arith.addf %77, %80 : vector<32x128xf32>
    %cst_50 = arith.constant 1.000000e-01 : f32
    %82 = vector.broadcast %cst_50 : f32 to vector<32x128xf32>
    %83 = arith.mulf %82, %81 : vector<32x128xf32>
    %84 = arith.addf %63, %83 : vector<32x128xf32>
    %85 = arith.truncf %84 : vector<32x128xf32> to vector<32x128xbf16>
    %c3 = arith.constant 3 : index
    %c0_51 = arith.constant 0 : index
    %c0_52 = arith.constant 0 : index
    %86 = vector.load %arg4[%c3, %c0_51, %c0_52] : memref<10x128x128xbf16, #tpu.memory_space<vmem>>, vector<1x128x128xbf16>
    %87 = vector.shape_cast %86 : vector<1x128x128xbf16> to vector<128x128xbf16>
    %cst_53 = arith.constant dense<0.000000e+00> : vector<32x128xf32>
    %88 = tpu.matmul %85, %87, %cst_53 {dimension_numbers = #tpu.dot_dimension_numbers<[1], [0], [0], [1], [0, 0, 1, 1], [], []>} : vector<32x128xbf16>, vector<128x128xbf16>, vector<32x128xf32> -> vector<32x128xf32>
    %c3_54 = arith.constant 3 : index
    %c0_55 = arith.constant 0 : index
    %c0_56 = arith.constant 0 : index
    %89 = vector.load %arg5[%c3_54, %c0_55, %c0_56] : memref<10x1x128xf32, #tpu.memory_space<vmem>>, vector<1x1x128xf32>
    %90 = vector.shape_cast %89 : vector<1x1x128xf32> to vector<1x128xf32>
    %91 = vector.broadcast %90 : vector<1x128xf32> to vector<32x128xf32>
    %92 = arith.addf %88, %91 : vector<32x128xf32>
    %cst_57 = arith.constant 0.000000e+00 : f32
    %93 = vector.broadcast %cst_57 : f32 to vector<32x128xf32>
    %94 = arith.maximumf %92, %93 : vector<32x128xf32>
    %95 = arith.truncf %94 : vector<32x128xf32> to vector<32x128xbf16>
    %c3_58 = arith.constant 3 : index
    %c0_59 = arith.constant 0 : index
    %c0_60 = arith.constant 0 : index
    %96 = vector.load %arg6[%c3_58, %c0_59, %c0_60] : memref<10x128x128xbf16, #tpu.memory_space<vmem>>, vector<1x128x128xbf16>
    %97 = vector.shape_cast %96 : vector<1x128x128xbf16> to vector<128x128xbf16>
    %cst_61 = arith.constant dense<0.000000e+00> : vector<32x128xf32>
    %98 = tpu.matmul %95, %97, %cst_61 {dimension_numbers = #tpu.dot_dimension_numbers<[1], [0], [0], [1], [0, 0, 1, 1], [], []>} : vector<32x128xbf16>, vector<128x128xbf16>, vector<32x128xf32> -> vector<32x128xf32>
    %c3_62 = arith.constant 3 : index
    %c0_63 = arith.constant 0 : index
    %c0_64 = arith.constant 0 : index
    %99 = vector.load %arg7[%c3_62, %c0_63, %c0_64] : memref<10x1x128xf32, #tpu.memory_space<vmem>>, vector<1x1x128xf32>
    %100 = vector.shape_cast %99 : vector<1x1x128xf32> to vector<1x128xf32>
    %101 = vector.broadcast %100 : vector<1x128xf32> to vector<32x128xf32>
    %102 = arith.addf %98, %101 : vector<32x128xf32>
    %cst_65 = arith.constant 1.000000e-01 : f32
    %103 = vector.broadcast %cst_65 : f32 to vector<32x128xf32>
    %104 = arith.mulf %103, %102 : vector<32x128xf32>
    %105 = arith.addf %84, %104 : vector<32x128xf32>
    %106 = arith.truncf %105 : vector<32x128xf32> to vector<32x128xbf16>
    %c4 = arith.constant 4 : index
    %c0_66 = arith.constant 0 : index
    %c0_67 = arith.constant 0 : index
    %107 = vector.load %arg4[%c4, %c0_66, %c0_67] : memref<10x128x128xbf16, #tpu.memory_space<vmem>>, vector<1x128x128xbf16>
    %108 = vector.shape_cast %107 : vector<1x128x128xbf16> to vector<128x128xbf16>
    %cst_68 = arith.constant dense<0.000000e+00> : vector<32x128xf32>
    %109 = tpu.matmul %106, %108, %cst_68 {dimension_numbers = #tpu.dot_dimension_numbers<[1], [0], [0], [1], [0, 0, 1, 1], [], []>} : vector<32x128xbf16>, vector<128x128xbf16>, vector<32x128xf32> -> vector<32x128xf32>
    %c4_69 = arith.constant 4 : index
    %c0_70 = arith.constant 0 : index
    %c0_71 = arith.constant 0 : index
    %110 = vector.load %arg5[%c4_69, %c0_70, %c0_71] : memref<10x1x128xf32, #tpu.memory_space<vmem>>, vector<1x1x128xf32>
    %111 = vector.shape_cast %110 : vector<1x1x128xf32> to vector<1x128xf32>
    %112 = vector.broadcast %111 : vector<1x128xf32> to vector<32x128xf32>
    %113 = arith.addf %109, %112 : vector<32x128xf32>
    %cst_72 = arith.constant 0.000000e+00 : f32
    %114 = vector.broadcast %cst_72 : f32 to vector<32x128xf32>
    %115 = arith.maximumf %113, %114 : vector<32x128xf32>
    %116 = arith.truncf %115 : vector<32x128xf32> to vector<32x128xbf16>
    %c4_73 = arith.constant 4 : index
    %c0_74 = arith.constant 0 : index
    %c0_75 = arith.constant 0 : index
    %117 = vector.load %arg6[%c4_73, %c0_74, %c0_75] : memref<10x128x128xbf16, #tpu.memory_space<vmem>>, vector<1x128x128xbf16>
    %118 = vector.shape_cast %117 : vector<1x128x128xbf16> to vector<128x128xbf16>
    %cst_76 = arith.constant dense<0.000000e+00> : vector<32x128xf32>
    %119 = tpu.matmul %116, %118, %cst_76 {dimension_numbers = #tpu.dot_dimension_numbers<[1], [0], [0], [1], [0, 0, 1, 1], [], []>} : vector<32x128xbf16>, vector<128x128xbf16>, vector<32x128xf32> -> vector<32x128xf32>
    %c4_77 = arith.constant 4 : index
    %c0_78 = arith.constant 0 : index
    %c0_79 = arith.constant 0 : index
    %120 = vector.load %arg7[%c4_77, %c0_78, %c0_79] : memref<10x1x128xf32, #tpu.memory_space<vmem>>, vector<1x1x128xf32>
    %121 = vector.shape_cast %120 : vector<1x1x128xf32> to vector<1x128xf32>
    %122 = vector.broadcast %121 : vector<1x128xf32> to vector<32x128xf32>
    %123 = arith.addf %119, %122 : vector<32x128xf32>
    %cst_80 = arith.constant 1.000000e-01 : f32
    %124 = vector.broadcast %cst_80 : f32 to vector<32x128xf32>
    %125 = arith.mulf %124, %123 : vector<32x128xf32>
    %126 = arith.addf %105, %125 : vector<32x128xf32>
    %127 = arith.truncf %126 : vector<32x128xf32> to vector<32x128xbf16>
    %c5 = arith.constant 5 : index
    %c0_81 = arith.constant 0 : index
    %c0_82 = arith.constant 0 : index
    %128 = vector.load %arg4[%c5, %c0_81, %c0_82] : memref<10x128x128xbf16, #tpu.memory_space<vmem>>, vector<1x128x128xbf16>
    %129 = vector.shape_cast %128 : vector<1x128x128xbf16> to vector<128x128xbf16>
    %cst_83 = arith.constant dense<0.000000e+00> : vector<32x128xf32>
    %130 = tpu.matmul %127, %129, %cst_83 {dimension_numbers = #tpu.dot_dimension_numbers<[1], [0], [0], [1], [0, 0, 1, 1], [], []>} : vector<32x128xbf16>, vector<128x128xbf16>, vector<32x128xf32> -> vector<32x128xf32>
    %c5_84 = arith.constant 5 : index
    %c0_85 = arith.constant 0 : index
    %c0_86 = arith.constant 0 : index
    %131 = vector.load %arg5[%c5_84, %c0_85, %c0_86] : memref<10x1x128xf32, #tpu.memory_space<vmem>>, vector<1x1x128xf32>
    %132 = vector.shape_cast %131 : vector<1x1x128xf32> to vector<1x128xf32>
    %133 = vector.broadcast %132 : vector<1x128xf32> to vector<32x128xf32>
    %134 = arith.addf %130, %133 : vector<32x128xf32>
    %cst_87 = arith.constant 0.000000e+00 : f32
    %135 = vector.broadcast %cst_87 : f32 to vector<32x128xf32>
    %136 = arith.maximumf %134, %135 : vector<32x128xf32>
    %137 = arith.truncf %136 : vector<32x128xf32> to vector<32x128xbf16>
    %c5_88 = arith.constant 5 : index
    %c0_89 = arith.constant 0 : index
    %c0_90 = arith.constant 0 : index
    %138 = vector.load %arg6[%c5_88, %c0_89, %c0_90] : memref<10x128x128xbf16, #tpu.memory_space<vmem>>, vector<1x128x128xbf16>
    %139 = vector.shape_cast %138 : vector<1x128x128xbf16> to vector<128x128xbf16>
    %cst_91 = arith.constant dense<0.000000e+00> : vector<32x128xf32>
    %140 = tpu.matmul %137, %139, %cst_91 {dimension_numbers = #tpu.dot_dimension_numbers<[1], [0], [0], [1], [0, 0, 1, 1], [], []>} : vector<32x128xbf16>, vector<128x128xbf16>, vector<32x128xf32> -> vector<32x128xf32>
    %c5_92 = arith.constant 5 : index
    %c0_93 = arith.constant 0 : index
    %c0_94 = arith.constant 0 : index
    %141 = vector.load %arg7[%c5_92, %c0_93, %c0_94] : memref<10x1x128xf32, #tpu.memory_space<vmem>>, vector<1x1x128xf32>
    %142 = vector.shape_cast %141 : vector<1x1x128xf32> to vector<1x128xf32>
    %143 = vector.broadcast %142 : vector<1x128xf32> to vector<32x128xf32>
    %144 = arith.addf %140, %143 : vector<32x128xf32>
    %cst_95 = arith.constant 1.000000e-01 : f32
    %145 = vector.broadcast %cst_95 : f32 to vector<32x128xf32>
    %146 = arith.mulf %145, %144 : vector<32x128xf32>
    %147 = arith.addf %126, %146 : vector<32x128xf32>
    %148 = arith.truncf %147 : vector<32x128xf32> to vector<32x128xbf16>
    %c6 = arith.constant 6 : index
    %c0_96 = arith.constant 0 : index
    %c0_97 = arith.constant 0 : index
    %149 = vector.load %arg4[%c6, %c0_96, %c0_97] : memref<10x128x128xbf16, #tpu.memory_space<vmem>>, vector<1x128x128xbf16>
    %150 = vector.shape_cast %149 : vector<1x128x128xbf16> to vector<128x128xbf16>
    %cst_98 = arith.constant dense<0.000000e+00> : vector<32x128xf32>
    %151 = tpu.matmul %148, %150, %cst_98 {dimension_numbers = #tpu.dot_dimension_numbers<[1], [0], [0], [1], [0, 0, 1, 1], [], []>} : vector<32x128xbf16>, vector<128x128xbf16>, vector<32x128xf32> -> vector<32x128xf32>
    %c6_99 = arith.constant 6 : index
    %c0_100 = arith.constant 0 : index
    %c0_101 = arith.constant 0 : index
    %152 = vector.load %arg5[%c6_99, %c0_100, %c0_101] : memref<10x1x128xf32, #tpu.memory_space<vmem>>, vector<1x1x128xf32>
    %153 = vector.shape_cast %152 : vector<1x1x128xf32> to vector<1x128xf32>
    %154 = vector.broadcast %153 : vector<1x128xf32> to vector<32x128xf32>
    %155 = arith.addf %151, %154 : vector<32x128xf32>
    %cst_102 = arith.constant 0.000000e+00 : f32
    %156 = vector.broadcast %cst_102 : f32 to vector<32x128xf32>
    %157 = arith.maximumf %155, %156 : vector<32x128xf32>
    %158 = arith.truncf %157 : vector<32x128xf32> to vector<32x128xbf16>
    %c6_103 = arith.constant 6 : index
    %c0_104 = arith.constant 0 : index
    %c0_105 = arith.constant 0 : index
    %159 = vector.load %arg6[%c6_103, %c0_104, %c0_105] : memref<10x128x128xbf16, #tpu.memory_space<vmem>>, vector<1x128x128xbf16>
    %160 = vector.shape_cast %159 : vector<1x128x128xbf16> to vector<128x128xbf16>
    %cst_106 = arith.constant dense<0.000000e+00> : vector<32x128xf32>
    %161 = tpu.matmul %158, %160, %cst_106 {dimension_numbers = #tpu.dot_dimension_numbers<[1], [0], [0], [1], [0, 0, 1, 1], [], []>} : vector<32x128xbf16>, vector<128x128xbf16>, vector<32x128xf32> -> vector<32x128xf32>
    %c6_107 = arith.constant 6 : index
    %c0_108 = arith.constant 0 : index
    %c0_109 = arith.constant 0 : index
    %162 = vector.load %arg7[%c6_107, %c0_108, %c0_109] : memref<10x1x128xf32, #tpu.memory_space<vmem>>, vector<1x1x128xf32>
    %163 = vector.shape_cast %162 : vector<1x1x128xf32> to vector<1x128xf32>
    %164 = vector.broadcast %163 : vector<1x128xf32> to vector<32x128xf32>
    %165 = arith.addf %161, %164 : vector<32x128xf32>
    %cst_110 = arith.constant 1.000000e-01 : f32
    %166 = vector.broadcast %cst_110 : f32 to vector<32x128xf32>
    %167 = arith.mulf %166, %165 : vector<32x128xf32>
    %168 = arith.addf %147, %167 : vector<32x128xf32>
    %169 = arith.truncf %168 : vector<32x128xf32> to vector<32x128xbf16>
    %c7 = arith.constant 7 : index
    %c0_111 = arith.constant 0 : index
    %c0_112 = arith.constant 0 : index
    %170 = vector.load %arg4[%c7, %c0_111, %c0_112] : memref<10x128x128xbf16, #tpu.memory_space<vmem>>, vector<1x128x128xbf16>
    %171 = vector.shape_cast %170 : vector<1x128x128xbf16> to vector<128x128xbf16>
    %cst_113 = arith.constant dense<0.000000e+00> : vector<32x128xf32>
    %172 = tpu.matmul %169, %171, %cst_113 {dimension_numbers = #tpu.dot_dimension_numbers<[1], [0], [0], [1], [0, 0, 1, 1], [], []>} : vector<32x128xbf16>, vector<128x128xbf16>, vector<32x128xf32> -> vector<32x128xf32>
    %c7_114 = arith.constant 7 : index
    %c0_115 = arith.constant 0 : index
    %c0_116 = arith.constant 0 : index
    %173 = vector.load %arg5[%c7_114, %c0_115, %c0_116] : memref<10x1x128xf32, #tpu.memory_space<vmem>>, vector<1x1x128xf32>
    %174 = vector.shape_cast %173 : vector<1x1x128xf32> to vector<1x128xf32>
    %175 = vector.broadcast %174 : vector<1x128xf32> to vector<32x128xf32>
    %176 = arith.addf %172, %175 : vector<32x128xf32>
    %cst_117 = arith.constant 0.000000e+00 : f32
    %177 = vector.broadcast %cst_117 : f32 to vector<32x128xf32>
    %178 = arith.maximumf %176, %177 : vector<32x128xf32>
    %179 = arith.truncf %178 : vector<32x128xf32> to vector<32x128xbf16>
    %c7_118 = arith.constant 7 : index
    %c0_119 = arith.constant 0 : index
    %c0_120 = arith.constant 0 : index
    %180 = vector.load %arg6[%c7_118, %c0_119, %c0_120] : memref<10x128x128xbf16, #tpu.memory_space<vmem>>, vector<1x128x128xbf16>
    %181 = vector.shape_cast %180 : vector<1x128x128xbf16> to vector<128x128xbf16>
    %cst_121 = arith.constant dense<0.000000e+00> : vector<32x128xf32>
    %182 = tpu.matmul %179, %181, %cst_121 {dimension_numbers = #tpu.dot_dimension_numbers<[1], [0], [0], [1], [0, 0, 1, 1], [], []>} : vector<32x128xbf16>, vector<128x128xbf16>, vector<32x128xf32> -> vector<32x128xf32>
    %c7_122 = arith.constant 7 : index
    %c0_123 = arith.constant 0 : index
    %c0_124 = arith.constant 0 : index
    %183 = vector.load %arg7[%c7_122, %c0_123, %c0_124] : memref<10x1x128xf32, #tpu.memory_space<vmem>>, vector<1x1x128xf32>
    %184 = vector.shape_cast %183 : vector<1x1x128xf32> to vector<1x128xf32>
    %185 = vector.broadcast %184 : vector<1x128xf32> to vector<32x128xf32>
    %186 = arith.addf %182, %185 : vector<32x128xf32>
    %cst_125 = arith.constant 1.000000e-01 : f32
    %187 = vector.broadcast %cst_125 : f32 to vector<32x128xf32>
    %188 = arith.mulf %187, %186 : vector<32x128xf32>
    %189 = arith.addf %168, %188 : vector<32x128xf32>
    %190 = arith.truncf %189 : vector<32x128xf32> to vector<32x128xbf16>
    %c8 = arith.constant 8 : index
    %c0_126 = arith.constant 0 : index
    %c0_127 = arith.constant 0 : index
    %191 = vector.load %arg4[%c8, %c0_126, %c0_127] : memref<10x128x128xbf16, #tpu.memory_space<vmem>>, vector<1x128x128xbf16>
    %192 = vector.shape_cast %191 : vector<1x128x128xbf16> to vector<128x128xbf16>
    %cst_128 = arith.constant dense<0.000000e+00> : vector<32x128xf32>
    %193 = tpu.matmul %190, %192, %cst_128 {dimension_numbers = #tpu.dot_dimension_numbers<[1], [0], [0], [1], [0, 0, 1, 1], [], []>} : vector<32x128xbf16>, vector<128x128xbf16>, vector<32x128xf32> -> vector<32x128xf32>
    %c8_129 = arith.constant 8 : index
    %c0_130 = arith.constant 0 : index
    %c0_131 = arith.constant 0 : index
    %194 = vector.load %arg5[%c8_129, %c0_130, %c0_131] : memref<10x1x128xf32, #tpu.memory_space<vmem>>, vector<1x1x128xf32>
    %195 = vector.shape_cast %194 : vector<1x1x128xf32> to vector<1x128xf32>
    %196 = vector.broadcast %195 : vector<1x128xf32> to vector<32x128xf32>
    %197 = arith.addf %193, %196 : vector<32x128xf32>
    %cst_132 = arith.constant 0.000000e+00 : f32
    %198 = vector.broadcast %cst_132 : f32 to vector<32x128xf32>
    %199 = arith.maximumf %197, %198 : vector<32x128xf32>
    %200 = arith.truncf %199 : vector<32x128xf32> to vector<32x128xbf16>
    %c8_133 = arith.constant 8 : index
    %c0_134 = arith.constant 0 : index
    %c0_135 = arith.constant 0 : index
    %201 = vector.load %arg6[%c8_133, %c0_134, %c0_135] : memref<10x128x128xbf16, #tpu.memory_space<vmem>>, vector<1x128x128xbf16>
    %202 = vector.shape_cast %201 : vector<1x128x128xbf16> to vector<128x128xbf16>
    %cst_136 = arith.constant dense<0.000000e+00> : vector<32x128xf32>
    %203 = tpu.matmul %200, %202, %cst_136 {dimension_numbers = #tpu.dot_dimension_numbers<[1], [0], [0], [1], [0, 0, 1, 1], [], []>} : vector<32x128xbf16>, vector<128x128xbf16>, vector<32x128xf32> -> vector<32x128xf32>
    %c8_137 = arith.constant 8 : index
    %c0_138 = arith.constant 0 : index
    %c0_139 = arith.constant 0 : index
    %204 = vector.load %arg7[%c8_137, %c0_138, %c0_139] : memref<10x1x128xf32, #tpu.memory_space<vmem>>, vector<1x1x128xf32>
    %205 = vector.shape_cast %204 : vector<1x1x128xf32> to vector<1x128xf32>
    %206 = vector.broadcast %205 : vector<1x128xf32> to vector<32x128xf32>
    %207 = arith.addf %203, %206 : vector<32x128xf32>
    %cst_140 = arith.constant 1.000000e-01 : f32
    %208 = vector.broadcast %cst_140 : f32 to vector<32x128xf32>
    %209 = arith.mulf %208, %207 : vector<32x128xf32>
    %210 = arith.addf %189, %209 : vector<32x128xf32>
    %211 = arith.truncf %210 : vector<32x128xf32> to vector<32x128xbf16>
    %c9 = arith.constant 9 : index
    %c0_141 = arith.constant 0 : index
    %c0_142 = arith.constant 0 : index
    %212 = vector.load %arg4[%c9, %c0_141, %c0_142] : memref<10x128x128xbf16, #tpu.memory_space<vmem>>, vector<1x128x128xbf16>
    %213 = vector.shape_cast %212 : vector<1x128x128xbf16> to vector<128x128xbf16>
    %cst_143 = arith.constant dense<0.000000e+00> : vector<32x128xf32>
    %214 = tpu.matmul %211, %213, %cst_143 {dimension_numbers = #tpu.dot_dimension_numbers<[1], [0], [0], [1], [0, 0, 1, 1], [], []>} : vector<32x128xbf16>, vector<128x128xbf16>, vector<32x128xf32> -> vector<32x128xf32>
    %c9_144 = arith.constant 9 : index
    %c0_145 = arith.constant 0 : index
    %c0_146 = arith.constant 0 : index
    %215 = vector.load %arg5[%c9_144, %c0_145, %c0_146] : memref<10x1x128xf32, #tpu.memory_space<vmem>>, vector<1x1x128xf32>
    %216 = vector.shape_cast %215 : vector<1x1x128xf32> to vector<1x128xf32>
    %217 = vector.broadcast %216 : vector<1x128xf32> to vector<32x128xf32>
    %218 = arith.addf %214, %217 : vector<32x128xf32>
    %cst_147 = arith.constant 0.000000e+00 : f32
    %219 = vector.broadcast %cst_147 : f32 to vector<32x128xf32>
    %220 = arith.maximumf %218, %219 : vector<32x128xf32>
    %221 = arith.truncf %220 : vector<32x128xf32> to vector<32x128xbf16>
    %c9_148 = arith.constant 9 : index
    %c0_149 = arith.constant 0 : index
    %c0_150 = arith.constant 0 : index
    %222 = vector.load %arg6[%c9_148, %c0_149, %c0_150] : memref<10x128x128xbf16, #tpu.memory_space<vmem>>, vector<1x128x128xbf16>
    %223 = vector.shape_cast %222 : vector<1x128x128xbf16> to vector<128x128xbf16>
    %cst_151 = arith.constant dense<0.000000e+00> : vector<32x128xf32>
    %224 = tpu.matmul %221, %223, %cst_151 {dimension_numbers = #tpu.dot_dimension_numbers<[1], [0], [0], [1], [0, 0, 1, 1], [], []>} : vector<32x128xbf16>, vector<128x128xbf16>, vector<32x128xf32> -> vector<32x128xf32>
    %c9_152 = arith.constant 9 : index
    %c0_153 = arith.constant 0 : index
    %c0_154 = arith.constant 0 : index
    %225 = vector.load %arg7[%c9_152, %c0_153, %c0_154] : memref<10x1x128xf32, #tpu.memory_space<vmem>>, vector<1x1x128xf32>
    %226 = vector.shape_cast %225 : vector<1x1x128xf32> to vector<1x128xf32>
    %227 = vector.broadcast %226 : vector<1x128xf32> to vector<32x128xf32>
    %228 = arith.addf %224, %227 : vector<32x128xf32>
    %cst_155 = arith.constant 1.000000e-01 : f32
    %229 = vector.broadcast %cst_155 : f32 to vector<32x128xf32>
    %230 = arith.mulf %229, %228 : vector<32x128xf32>
    %231 = arith.addf %210, %230 : vector<32x128xf32>
    %c0_156 = arith.constant 0 : index
    %c0_157 = arith.constant 0 : index
    %232 = vector.load %arg8[%c0_156, %c0_157] : memref<32x128xf32, #tpu.memory_space<vmem>>, vector<32x128xf32>
    tpu.vector_store %arg8[%c0_156, %c0_157], %231 {strides = array<i32>} : memref<32x128xf32, #tpu.memory_space<vmem>>, vector<32x128xf32>,
    return
  }
  func.func @transform_0(%arg0: i32, %arg1: i32) -> (i32, i32) {
    %c0_i32 = arith.constant 0 : i32
    %c0_i32_0 = arith.constant 0 : i32
    return %arg0, %c0_i32 : i32, i32
  }
  func.func @transform_1(%arg0: i32, %arg1: i32) -> (i32, i32) {
    %c0_i32 = arith.constant 0 : i32
    %c0_i32_0 = arith.constant 0 : i32
    %c0_i32_1 = arith.constant 0 : i32
    return %c0_i32, %c0_i32_0 : i32, i32
  }
  func.func @transform_2(%arg0: i32, %arg1: i32) -> (i32, i32, i32) {
    %c0_i32 = arith.constant 0 : i32
    %c0_i32_0 = arith.constant 0 : i32
    %c0_i32_1 = arith.constant 0 : i32
    return %arg1, %c0_i32, %c0_i32_0 : i32, i32, i32
  }
  func.func @transform_3(%arg0: i32, %arg1: i32) -> (i32, i32, i32) {
    %c0_i32 = arith.constant 0 : i32
    %c0_i32_0 = arith.constant 0 : i32
    %c0_i32_1 = arith.constant 0 : i32
    return %arg1, %c0_i32, %c0_i32_0 : i32, i32, i32
  }
  func.func @transform_4(%arg0: i32, %arg1: i32) -> (i32, i32, i32) {
    %c0_i32 = arith.constant 0 : i32
    %c0_i32_0 = arith.constant 0 : i32
    %c0_i32_1 = arith.constant 0 : i32
    return %arg1, %c0_i32, %c0_i32_0 : i32, i32, i32
  }
  func.func @transform_5(%arg0: i32, %arg1: i32) -> (i32, i32, i32) {
    %c0_i32 = arith.constant 0 : i32
    %c0_i32_0 = arith.constant 0 : i32
    %c0_i32_1 = arith.constant 0 : i32
    return %arg1, %c0_i32, %c0_i32_0 : i32, i32, i32
  }
  func.func @transform_6(%arg0: i32, %arg1: i32) -> (i32, i32) {
    %c0_i32 = arith.constant 0 : i32
    %c0_i32_0 = arith.constant 0 : i32
    return %arg0, %c0_i32 : i32, i32
  }
}

</mosaic_0001>

<llo_original>
// kernel: net_forward.1
$region0: #{net_forward.1}
  #allocation0 [shape = 'u32[]', space=smem, size = 0x4, offset = 0x4, fixed_abs, tag = 'smem constant byte address 0x4 - core index']
  #allocation1 [shape = 'u32[72,128]{1,0:T(1,128)}', space=vmem, size = 0x9000, scoped, tag = 'internal scratch']
  %s0 = inlined_call_operand.vmem [shape: f32[64,128], index: 0, kind: input, shape index: {}]
  %s1 = inlined_call_operand.hbm [shape: f32[1,128], index: 1, kind: input, shape index: {}]
  %s2 = inlined_call_operand.hbm [shape: bf16[50,128,128], index: 2, kind: input, shape index: {}]
  %s3 = inlined_call_operand.hbm [shape: f32[50,1,128], index: 3, kind: input, shape index: {}]
  %s4 = inlined_call_operand.hbm [shape: bf16[50,128,128], index: 4, kind: input, shape index: {}]
  %s5 = inlined_call_operand.hbm [shape: f32[50,1,128], index: 5, kind: input, shape index: {}]
  %s6 = inlined_call_operand.vmem [shape: f32[64,128], index: 6, kind: output, shape index: {}]
  %s7 = sld [smem:[#allocation0]]
  $region81: #{net_forward.1} parent=0
    _
  %s9 = ssub.s32 1, %s7
  %s10 = scalar_select 0, %s9, %s7
  $region1: #{net_forward.1} parent=0
    #allocation2 [shape = 'u8[512]{0}', space=vmem, size = 0x400, scoped, tag = 'input window, operand 1, single buffered']
    #allocation3 [shape = 's32[2]{0}', space=sflag, size = 0x8, scoped, tag = 'scoped memory for net_forward.1']
    #allocation4 [shape = 'u8[655360]{0}', space=vmem, size = 0xa0000, scoped, tag = 'input window, operand 2']
    #allocation5 [shape = 's32[2]{0}', space=sflag, size = 0x8, scoped, tag = 'scoped memory for net_forward.1']
    #allocation6 [shape = 'u8[10240]{0}', space=vmem, size = 0x2800, scoped, tag = 'input window, operand 3']
    #allocation7 [shape = 'u8[655360]{0}', space=vmem, size = 0xa0000, scoped, tag = 'input window, operand 4']
    #allocation8 [shape = 's32[2]{0}', space=sflag, size = 0x8, scoped, tag = 'scoped memory for net_forward.1']
    #allocation9 [shape = 'u8[10240]{0}', space=vmem, size = 0x2800, scoped, tag = 'input window, operand 5']
    %11 = vsyncpa [#allocation3], 0
    %12 = vsyncpa [#allocation5], 0
    %s13 = scalar_lea.sflag [#allocation5], 1
    %14 = vsyncpa %s13, 0
    %15 = vsyncpa [#allocation8], 0
    %s16 = scalar_lea.sflag [#allocation8], 1
    %17 = vsyncpa %s16, 0
    loop: start=0, step=1, limit=12
    $region2: #{net_forward.1} parent=1 // loop_pre_header
      _
    $region3: #{net_forward.1} parent=1 // loop_header
      %s19 = sphi 0, %s23
      %p20 = scmp.ge.s32.totalorder %s19, 12
      %s26 = sphi 0, %s38
      %s27 = sphi 0, %s34
      %s28 = sphi 0, %s26
      %s29 = sphi 0, %s27
      %s30 = sphi 0, %s28
      %s31 = sphi 0, %s29
      %s41 = sphi 0, %s43
      %s44 = sphi 0, %s41
      %s45 = sphi 0, %s44
      %s61 = sphi 0, %s45
      %s65 = sphi 0, %s65
      %s67 = sphi 0, %s65
      %s68 = sphi 0, %s67
      %s82 = sphi 0, %s68
      %s88 = sphi 0, %s90
      %s91 = sphi 0, %s88
      %s92 = sphi 0, %s91
      %s108 = sphi 0, %s92
      %s114 = sphi 0, %s116
      %s117 = sphi 0, %s114
      %s118 = sphi 0, %s117
      %s134 = sphi 0, %s118
      %s140 = sphi 0, %s142
      %s143 = sphi 0, %s140
      %s144 = sphi 0, %s143
      %s160 = sphi 0, %s144
      %s166 = sphi 0, %s168
      %s169 = sphi 0, %s166
      %s170 = sphi 0, %s169
      %s186 = sphi 0, %s170
      %s192 = sphi 0, %s194
      %s195 = sphi 0, %s192
      %s196 = sphi 0, %s195
      %s212 = sphi 0, %s196
    $region4: #{net_forward.1} parent=1 // loop_header_branch
      %22 = sbr.rel (%p20) target = $region8
    $region5: #{net_forward.1} parent=1 // loop_body
      %s24 = ssub.s32 %s19, 1
      %s25 = ssub.s32 %s19, 2
      %s32 = sadd.s32 1, %s27
      %p33 = scmp.ge.s32.totalorder %s32, 5
      %s34 = scalar_select %p33, 0, %s32
      %s35 = sadd.s32 1, %s26
      %s36 = scalar_select %p33, %s35, %s26
      %p37 = scmp.ge.s32.totalorder %s36, 2
      %s38 = scalar_select %p37, 0, %s36
      %s39 = ssub.s32 %s26, %s38
      %p40 = scmp.eq.s32.totalorder %s39, 0
      %s42 = sadd.s32 %s41, 1
      %s43 = scalar_select %p40, %s41, %s42
      %p46 = pneg %p40
      %p47 = scmp.eq.s32.totalorder %s19, 9
      %p48 = por %p46, %p47
      %p49 = scmp.ne.s32.totalorder %s41, %s44
      %p50 = scmp.eq.s32.totalorder %s19, 0
      %p51 = por %p49, %p50
      %p52 = scmp.ne.s32.totalorder %s41, %s44
      %p53 = scmp.eq.s32.totalorder %s24, 9
      %p54 = por %p52, %p53
      %p55 = scmp.ne.s32.totalorder %s44, %s45
      %p56 = scmp.eq.s32.totalorder %s24, 0
      %p57 = por %p55, %p56
      %p58 = scmp.ne.s32.totalorder %s44, %s45
      %p59 = scmp.eq.s32.totalorder %s25, 9
      %p60 = por %p58, %p59
      %p62 = scmp.ne.s32.totalorder %s45, %s61
      %p63 = scmp.eq.s32.totalorder %s25, 0
      %p64 = por %p62, %p63
      %s66 = sadd.s32 %s65, 1
      %p69 = scmp.eq.s32.totalorder %s19, 9
      %p70 = scmp.ne.s32.totalorder %s65, %s67
      %p71 = scmp.eq.s32.totalorder %s19, 0
      %p72 = por %p70, %p71
      %p73 = scmp.ne.s32.totalorder %s65, %s67
      %p74 = scmp.eq.s32.totalorder %s24, 9
      %p75 = por %p73, %p74
      %p76 = scmp.ne.s32.totalorder %s67, %s68
      %p77 = scmp.eq.s32.totalorder %s24, 0
      %p78 = por %p76, %p77
      %p79 = scmp.ne.s32.totalorder %s67, %s68
      %p80 = scmp.eq.s32.totalorder %s25, 9
      %p81 = por %p79, %p80
      %p83 = scmp.ne.s32.totalorder %s68, %s82
      %p84 = scmp.eq.s32.totalorder %s25, 0
      %p85 = por %p83, %p84
      %s86 = ssub.s32 %s27, %s34
      %p87 = scmp.eq.s32.totalorder %s86, 0
      %s89 = sadd.s32 %s88, 1
      %s90 = scalar_select %p87, %s88, %s89
      %p93 = pneg %p87
      %p94 = scmp.eq.s32.totalorder %s19, 9
      %p95 = por %p93, %p94
      %p96 = scmp.ne.s32.totalorder %s88, %s91
      %p97 = scmp.eq.s32.totalorder %s19, 0
      %p98 = por %p96, %p97
      %p99 = scmp.ne.s32.totalorder %s88, %s91
      %p100 = scmp.eq.s32.totalorder %s24, 9
      %p101 = por %p99, %p100
      %p102 = scmp.ne.s32.totalorder %s91, %s92
      %p103 = scmp.eq.s32.totalorder %s24, 0
      %p104 = por %p102, %p103
      %p105 = scmp.ne.s32.totalorder %s91, %s92
      %p106 = scmp.eq.s32.totalorder %s25, 9
      %p107 = por %p105, %p106
      %p109 = scmp.ne.s32.totalorder %s92, %s108
      %p110 = scmp.eq.s32.totalorder %s25, 0
      %p111 = por %p109, %p110
      %s112 = ssub.s32 %s27, %s34
      %p113 = scmp.eq.s32.totalorder %s112, 0
      %s115 = sadd.s32 %s114, 1
      %s116 = scalar_select %p113, %s114, %s115
      %p119 = pneg %p113
      %p120 = scmp.eq.s32.totalorder %s19, 9
      %p121 = por %p119, %p120
      %p122 = scmp.ne.s32.totalorder %s114, %s117
      %p123 = scmp.eq.s32.totalorder %s19, 0
      %p124 = por %p122, %p123
      %p125 = scmp.ne.s32.totalorder %s114, %s117
      %p126 = scmp.eq.s32.totalorder %s24, 9
      %p127 = por %p125, %p126
      %p128 = scmp.ne.s32.totalorder %s117, %s118
      %p129 = scmp.eq.s32.totalorder %s24, 0
      %p130 = por %p128, %p129
      %p131 = scmp.ne.s32.totalorder %s117, %s118
      %p132 = scmp.eq.s32.totalorder %s25, 9
      %p133 = por %p131, %p132
      %p135 = scmp.ne.s32.totalorder %s118, %s134
      %p136 = scmp.eq.s32.totalorder %s25, 0
      %p137 = por %p135, %p136
      %s138 = ssub.s32 %s27, %s34
      %p139 = scmp.eq.s32.totalorder %s138, 0
      %s141 = sadd.s32 %s140, 1
      %s142 = scalar_select %p139, %s140, %s141
      %p145 = pneg %p139
      %p146 = scmp.eq.s32.totalorder %s19, 9
      %p147 = por %p145, %p146
      %p148 = scmp.ne.s32.totalorder %s140, %s143
      %p149 = scmp.eq.s32.totalorder %s19, 0
      %p150 = por %p148, %p149
      %p151 = scmp.ne.s32.totalorder %s140, %s143
      %p152 = scmp.eq.s32.totalorder %s24, 9
      %p153 = por %p151, %p152
      %p154 = scmp.ne.s32.totalorder %s143, %s144
      %p155 = scmp.eq.s32.totalorder %s24, 0
      %p156 = por %p154, %p155
      %p157 = scmp.ne.s32.totalorder %s143, %s144
      %p158 = scmp.eq.s32.totalorder %s25, 9
      %p159 = por %p157, %p158
      %p161 = scmp.ne.s32.totalorder %s144, %s160
      %p162 = scmp.eq.s32.totalorder %s25, 0
      %p163 = por %p161, %p162
      %s164 = ssub.s32 %s27, %s34
      %p165 = scmp.eq.s32.totalorder %s164, 0
      %s167 = sadd.s32 %s166, 1
      %s168 = scalar_select %p165, %s166, %s167
      %p171 = pneg %p165
      %p172 = scmp.eq.s32.totalorder %s19, 9
      %p173 = por %p171, %p172
      %p174 = scmp.ne.s32.totalorder %s166, %s169
      %p175 = scmp.eq.s32.totalorder %s19, 0
      %p176 = por %p174, %p175
      %p177 = scmp.ne.s32.totalorder %s166, %s169
      %p178 = scmp.eq.s32.totalorder %s24, 9
      %p179 = por %p177, %p178
      %p180 = scmp.ne.s32.totalorder %s169, %s170
      %p181 = scmp.eq.s32.totalorder %s24, 0
      %p182 = por %p180, %p181
      %p183 = scmp.ne.s32.totalorder %s169, %s170
      %p184 = scmp.eq.s32.totalorder %s25, 9
      %p185 = por %p183, %p184
      %p187 = scmp.ne.s32.totalorder %s170, %s186
      %p188 = scmp.eq.s32.totalorder %s25, 0
      %p189 = por %p187, %p188
      %s190 = ssub.s32 %s26, %s38
      %p191 = scmp.eq.s32.totalorder %s190, 0
      %s193 = sadd.s32 %s192, 1
      %s194 = scalar_select %p191, %s192, %s193
      %p197 = pneg %p191
      %p198 = scmp.eq.s32.totalorder %s19, 9
      %p199 = por %p197, %p198
      %p200 = scmp.ne.s32.totalorder %s192, %s195
      %p201 = scmp.eq.s32.totalorder %s19, 0
      %p202 = por %p200, %p201
      %p203 = scmp.ne.s32.totalorder %s192, %s195
      %p204 = scmp.eq.s32.totalorder %s24, 9
      %p205 = por %p203, %p204
      %p206 = scmp.ne.s32.totalorder %s195, %s196
      %p207 = scmp.eq.s32.totalorder %s24, 0
      %p208 = por %p206, %p207
      %p209 = scmp.ne.s32.totalorder %s195, %s196
      %p210 = scmp.eq.s32.totalorder %s25, 9
      %p211 = por %p209, %p210
      %p213 = scmp.ne.s32.totalorder %s196, %s212
      %p214 = scmp.eq.s32.totalorder %s25, 0
      %p215 = por %p213, %p214
      %p216 = scmp.le.s32.totalorder 1, %s19
      %p217 = scmp.lt.s32.totalorder %s19, 11
      %p218 = pnand %p216, %p217
      %p219 = pneg %p218
      // Predicated region
      $region9: #{net_forward.1} parent=5 // pred_check
        _
      $region10: #{net_forward.1} parent=5 // pred_check_branch
        %221 = sbr.rel (%p218) target = $region12
      $region11: #{net_forward.1} parent=5 // pred_region
        %s222 = ssub.s32 %s19, 1
        // Predicated region
        $region13: #{net_forward.1} parent=11 // pred_check
          %p223 = pneg %p78
        $region14: #{net_forward.1} parent=11 // pred_check_branch
          %225 = sbr.rel (%p223) target = $region16
        $region15: #{net_forward.1} parent=11 // pred_region
          %227 = vsyncadd [#allocation3], 0
          %s229 = sshll.u32 %s1, 4
          %s230 = int_to_ptr.hbm [resolvable:$true] %s229
          %s231 = sshll.u32 [#allocation2], 4
          %s232 = int_to_ptr.vmem [resolvable:$true] %s231
          %234 = dma.hbm_to_vmem [thread:$0]  %s230, 16, %s232, [#allocation3]
        $region16: #{net_forward.1} parent=11 // pred_fallthru
          _
      $region12: #{net_forward.1} parent=5 // pred_fallthru
        _
      %p235 = scmp.lt.s32.totalorder %s19, 10
      // Predicated region
      $region17: #{net_forward.1} parent=5 // pred_check
        %p236 = pneg %p235
      $region18: #{net_forward.1} parent=5 // pred_check_branch
        %238 = sbr.rel (%p236) target = $region20
      $region19: #{net_forward.1} parent=5 // pred_region
        // Predicated region
        $region21: #{net_forward.1} parent=19 // pred_check
          %p239 = pneg %p51
        $region22: #{net_forward.1} parent=19 // pred_check_branch
          %241 = sbr.rel (%p239) target = $region24
        $region23: #{net_forward.1} parent=19 // pred_region
          %s242 = smul.u32 4, %s26
          %p243 = scmp.lt.s32.totalorder %s242, 7
          %s244 = scalar_select %p243, %s242, 7
          %s245 = smul.addr %s244, 8
          %s246 = scalar_lea.vmem %s0, %s245
          %s247 = smul.u32 4, %s26
        $region24: #{net_forward.1} parent=19 // pred_fallthru
          _
        // Predicated region
        $region25: #{net_forward.1} parent=19 // pred_check
          %p248 = pneg %p98
        $region26: #{net_forward.1} parent=19 // pred_check_branch
          %250 = sbr.rel (%p248) target = $region28
        $region27: #{net_forward.1} parent=19 // pred_region
          %s251 = sand.u32 %s19, 1
          %s252 = scalar_lea.sflag [#allocation5], %s251
          %s253 = sand.u32 %s88, 1
          %s254 = smul.addr %s253, 640
          %s255 = scalar_lea.vmem [#allocation4], %s254
          %s256 = smul.u32 10, %s27
          %258 = vsyncadd %s252, 0
          %s259 = smul.addr %s256, 16
          %s260 = smul.addr %s259, 4
          %s261 = scalar_lea.hbm %s2, %s260
          %s262 = sshll.u32 %s261, 4
          %s263 = int_to_ptr.hbm [resolvable:$true] %s262
          %s264 = sshll.u32 %s255, 4
          %s265 = int_to_ptr.vmem [resolvable:$true] %s264
          %270 = dma.hbm_to_vmem [thread:$0]  %s263, 10240, %s265, %s252, 64, 64, 4
        $region28: #{net_forward.1} parent=19 // pred_fallthru
          _
        // Predicated region
        $region29: #{net_forward.1} parent=19 // pred_check
          %p271 = pneg %p124
        $region30: #{net_forward.1} parent=19 // pred_check_branch
          %273 = sbr.rel (%p271) target = $region32
        $region31: #{net_forward.1} parent=19 // pred_region
          %s274 = sand.u32 %s19, 1
          %s275 = scalar_lea.sflag [#allocation5], %s274
          %s276 = sand.u32 %s114, 1
          %s277 = smul.addr %s276, 10
          %s278 = scalar_lea.vmem [#allocation6], %s277
          %s279 = smul.u32 10, %s27
          %281 = vsyncadd %s275, 0
          %s282 = scalar_lea.hbm %s3, %s279
          %s283 = sshll.u32 %s282, 4
          %s284 = int_to_ptr.hbm [resolvable:$true] %s283
          %s285 = sshll.u32 %s278, 4
          %s286 = int_to_ptr.vmem [resolvable:$true] %s285
          %291 = dma.hbm_to_vmem [thread:$0]  %s284, 160, %s286, %s275, 16, 16, 1
        $region32: #{net_forward.1} parent=19 // pred_fallthru
          _
        // Predicated region
        $region33: #{net_forward.1} parent=19 // pred_check
          %p292 = pneg %p150
        $region34: #{net_forward.1} parent=19 // pred_check_branch
          %294 = sbr.rel (%p292) target = $region36
        $region35: #{net_forward.1} parent=19 // pred_region
          %s295 = sand.u32 %s19, 1
          %s296 = scalar_lea.sflag [#allocation8], %s295
          %s297 = sand.u32 %s140, 1
          %s298 = smul.addr %s297, 640
          %s299 = scalar_lea.vmem [#allocation7], %s298
          %s300 = smul.u32 10, %s27
          %302 = vsyncadd %s296, 0
          %s303 = smul.addr %s300, 16
          %s304 = smul.addr %s303, 4
          %s305 = scalar_lea.hbm %s4, %s304
          %s306 = sshll.u32 %s305, 4
          %s307 = int_to_ptr.hbm [resolvable:$true] %s306
          %s308 = sshll.u32 %s299, 4
          %s309 = int_to_ptr.vmem [resolvable:$true] %s308
          %314 = dma.hbm_to_vmem [thread:$0]  %s307, 10240, %s309, %s296, 64, 64, 4
        $region36: #{net_forward.1} parent=19 // pred_fallthru
          _
        // Predicated region
        $region37: #{net_forward.1} parent=19 // pred_check
          %p315 = pneg %p176
        $region38: #{net_forward.1} parent=19 // pred_check_branch
          %317 = sbr.rel (%p315) target = $region40
        $region39: #{net_forward.1} parent=19 // pred_region
          %s318 = sand.u32 %s19, 1
          %s319 = scalar_lea.sflag [#allocation8], %s318
          %s320 = sand.u32 %s166, 1
          %s321 = smul.addr %s320, 10
          %s322 = scalar_lea.vmem [#allocation9], %s321
          %s323 = smul.u32 10, %s27
          %325 = vsyncadd %s319, 0
          %s326 = scalar_lea.hbm %s5, %s323
          %s327 = sshll.u32 %s326, 4
          %s328 = int_to_ptr.hbm [resolvable:$true] %s327
          %s329 = sshll.u32 %s322, 4
          %s330 = int_to_ptr.vmem [resolvable:$true] %s329
          %335 = dma.hbm_to_vmem [thread:$0]  %s328, 160, %s330, %s319, 16, 16, 1
        $region40: #{net_forward.1} parent=19 // pred_fallthru
          _
      $region20: #{net_forward.1} parent=5 // pred_fallthru
        _
      %p336 = scmp.le.s32.totalorder 1, %s19
      %p337 = scmp.lt.s32.totalorder %s19, 11
      %p338 = pnand %p336, %p337
      %p339 = pneg %p338
      // Predicated region
      $region41: #{net_forward.1} parent=5 // pred_check
        _
      $region42: #{net_forward.1} parent=5 // pred_check_branch
        %341 = sbr.rel (%p338) target = $region44
      $region43: #{net_forward.1} parent=5 // pred_region
        %s342 = ssub.s32 %s19, 1
        // Predicated region
        $region45: #{net_forward.1} parent=43 // pred_check
          %p343 = pneg %p78
        $region46: #{net_forward.1} parent=43 // pred_check_branch
          %345 = sbr.rel (%p343) target = $region48
        $region47: #{net_forward.1} parent=43 // pred_region
          %347 = dma.done [#allocation3], 16
        $region48: #{net_forward.1} parent=43 // pred_fallthru
          _
        %s348 = sand.u32 %s24, 1
        %s349 = scalar_lea.sflag [#allocation5], %s348
        %s350 = sand.u32 %s91, 1
        %s351 = smul.addr %s350, 640
        %s352 = scalar_lea.vmem [#allocation4], %s351
        // Predicated region
        $region49: #{net_forward.1} parent=43 // pred_check
          %p353 = pneg %p104
        $region50: #{net_forward.1} parent=43 // pred_check_branch
          %355 = sbr.rel (%p353) target = $region52
        $region51: #{net_forward.1} parent=43 // pred_region
          %357 = dma.done %s349, 10240
        $region52: #{net_forward.1} parent=43 // pred_fallthru
          _
        %s358 = sand.u32 %s24, 1
        %s359 = scalar_lea.sflag [#allocation5], %s358
        %s360 = sand.u32 %s117, 1
        %s361 = smul.addr %s360, 10
        %s362 = scalar_lea.vmem [#allocation6], %s361
        // Predicated region
        $region53: #{net_forward.1} parent=43 // pred_check
          %p363 = pneg %p130
        $region54: #{net_forward.1} parent=43 // pred_check_branch
          %365 = sbr.rel (%p363) target = $region56
        $region55: #{net_forward.1} parent=43 // pred_region
          %367 = dma.done %s359, 160
        $region56: #{net_forward.1} parent=43 // pred_fallthru
          _
        %s368 = sand.u32 %s24, 1
        %s369 = scalar_lea.sflag [#allocation8], %s368
        %s370 = sand.u32 %s143, 1
        %s371 = smul.addr %s370, 640
        %s372 = scalar_lea.vmem [#allocation7], %s371
        // Predicated region
        $region57: #{net_forward.1} parent=43 // pred_check
          %p373 = pneg %p156
        $region58: #{net_forward.1} parent=43 // pred_check_branch
          %375 = sbr.rel (%p373) target = $region60
        $region59: #{net_forward.1} parent=43 // pred_region
          %377 = dma.done %s369, 10240
        $region60: #{net_forward.1} parent=43 // pred_fallthru
          _
        %s378 = sand.u32 %s24, 1
        %s379 = scalar_lea.sflag [#allocation8], %s378
        %s380 = sand.u32 %s169, 1
        %s381 = smul.addr %s380, 10
        %s382 = scalar_lea.vmem [#allocation9], %s381
        // Predicated region
        $region61: #{net_forward.1} parent=43 // pred_check
          %p383 = pneg %p182
        $region62: #{net_forward.1} parent=43 // pred_check_branch
          %385 = sbr.rel (%p383) target = $region64
        $region63: #{net_forward.1} parent=43 // pred_region
          %387 = dma.done %s379, 160
        $region64: #{net_forward.1} parent=43 // pred_fallthru
          _
        %s388 = smul.u32 4, %s28
        %p389 = scmp.lt.s32.totalorder %s388, 7
        %s390 = scalar_select %p389, %s388, 7
        %s391 = smul.addr %s390, 8
        %s392 = scalar_lea.vmem %s0, %s391
        %p393 = pneg %p57
        %p394 = pneg %p54
        %p395 = pneg %p78
        %p396 = pneg %p75
        %s397 = sand.u32 %s24, 1
        %s398 = scalar_lea.sflag [#allocation5], %s397
        %s399 = sand.u32 %s91, 1
        %s400 = smul.addr %s399, 640
        %s401 = scalar_lea.vmem [#allocation4], %s400
        %p402 = pneg %p104
        %p403 = pneg %p101
        %s404 = sand.u32 %s24, 1
        %s405 = scalar_lea.sflag [#allocation5], %s404
        %s406 = sand.u32 %s117, 1
        %s407 = smul.addr %s406, 10
        %s408 = scalar_lea.vmem [#allocation6], %s407
        %p409 = pneg %p130
        %p410 = pneg %p127
        %s411 = sand.u32 %s24, 1
        %s412 = scalar_lea.sflag [#allocation8], %s411
        %s413 = sand.u32 %s143, 1
        %s414 = smul.addr %s413, 640
        %s415 = scalar_lea.vmem [#allocation7], %s414
        %p416 = pneg %p156
        %p417 = pneg %p153
        %s418 = sand.u32 %s24, 1
        %s419 = scalar_lea.sflag [#allocation8], %s418
        %s420 = sand.u32 %s169, 1
        %s421 = smul.addr %s420, 10
        %s422 = scalar_lea.vmem [#allocation9], %s421
        %p423 = pneg %p182
        %p424 = pneg %p179
        %p425 = pneg %p208
        %p426 = pneg %p205
        %s427 = smul.u32 4, %s28
        %p428 = scmp.lt.s32.totalorder %s427, 7
        %s429 = scalar_select %p428, %s427, 7
        %s430 = smul.addr %s429, 8
        %s431 = scalar_lea.vmem %s6, %s430
        %s432 = smul.u32 4, %s28
        %p433 = scmp.lt.s32.totalorder %s432, 7
        %s434 = scalar_select %p433, %s432, 7
        %s435 = smul.addr %s434, 8
        %s436 = scalar_lea.vmem %s0, %s435
        %s437 = smul.u32 4, %s28
        %s438 = smul.u32 10, %s29
        %s439 = smul.u32 10, %s29
        %s440 = smul.u32 10, %s29
        %s441 = smul.u32 10, %s29
        %s442 = smul.u32 4, %s28
        %p443 = scmp.lt.s32.totalorder %s442, 7
        %s444 = scalar_select %p443, %s442, 7
        %s445 = smul.addr %s444, 8
        %s446 = scalar_lea.vmem %s6, %s445
        %s447 = smul.u32 4, %s28
        %p448 = scmp.eq.s32.totalorder %s29, 0
        // Predicated region
        $region65: #{net_forward.1} parent=43 // pred_check
          %p449 = pneg %p448
        $region66: #{net_forward.1} parent=43 // pred_check_branch
          %451 = sbr.rel (%p449) target = $region68
        $region67: #{net_forward.1} parent=43 // pred_region
          %v452 = vld [vmem:[%s436] sm:$0xff]
          %v453 = vld [vmem:[%s436 + $0x8] sm:$0xff]
          %v454 = vld [vmem:[%s436 + $0x10] sm:$0xff]
          %v455 = vld [vmem:[%s436 + $0x18] sm:$0xff]
          %456 = vst [vmem:[%s446] sm:$0xff] %v452
          %457 = vst [vmem:[%s446 + $0x8] sm:$0xff] %v453
          %458 = vst [vmem:[%s446 + $0x10] sm:$0xff] %v454
          %459 = vst [vmem:[%s446 + $0x18] sm:$0xff] %v455
        $region68: #{net_forward.1} parent=43 // pred_fallthru
          _
        %v460 = vld [vmem:[%s446] sm:$0xff]
        %v461 = vld [vmem:[%s446 + $0x8] sm:$0xff]
        %v462 = vld [vmem:[%s446 + $0x10] sm:$0xff]
        %v463 = vld [vmem:[%s446 + $0x18] sm:$0xff]
        %v464 = vlaneseq
        %v465 = vand.u32 %v464, 127
        %vm466 = vcmp.lt.s32.totalorder %v465, 50
        %v467 = vsel %vm466, 1, 0
        %v468 = vcvt.s32.f32 %v467
        %v469 = vld [vmem:[#allocation2] sm:$0x1]
        %s470 = scalar_select %p448, 1, 0
        %s471 = scvt.s32.f32 %s470
        %v472 = vpack.c.bf16 %v461, %v460
        %v473 = vpack.c.bf16 %v463, %v462
        %v474 = vld [vmem:[%s352] sm:$0xf]
        %v475 = vld [vmem:[%s352 + $0x4] sm:$0xf]
        %v476 = vld [vmem:[%s352 + $0x8] sm:$0xf]
        %v477 = vld [vmem:[%s352 + $0xc] sm:$0xf]
        %v478 = vld [vmem:[%s352 + $0x10] sm:$0xf]
        %v479 = vld [vmem:[%s352 + $0x14] sm:$0xf]
        %v480 = vld [vmem:[%s352 + $0x18] sm:$0xf]
        %v481 = vld [vmem:[%s352 + $0x1c] sm:$0xf]
        %v482 = vld [vmem:[%s352 + $0x20] sm:$0xf]
        %v483 = vld [vmem:[%s352 + $0x24] sm:$0xf]
        %v484 = vld [vmem:[%s352 + $0x28] sm:$0xf]
        %v485 = vld [vmem:[%s352 + $0x2c] sm:$0xf]
        %v486 = vld [vmem:[%s352 + $0x30] sm:$0xf]
        %v487 = vld [vmem:[%s352 + $0x34] sm:$0xf]
        %v488 = vld [vmem:[%s352 + $0x38] sm:$0xf]
        %v489 = vld [vmem:[%s352 + $0x3c] sm:$0xf]
        %v490 = vld [vmem:[%s362] sm:$0x1]
        %v492 = vperm.slane %v490, 0
        %v510 = vunpack.c.l.b16 %v474
        %v511 = vunpack.c.l.b16 %v475
        %v512 = vunpack.c.l.b16 %v476
        %v513 = vunpack.c.l.b16 %v477
        %v514 = vunpack.c.l.b16 %v478
        %v515 = vunpack.c.l.b16 %v479
        %v516 = vunpack.c.l.b16 %v480
        %v517 = vunpack.c.l.b16 %v481
        %v518 = vunpack.c.l.b16 %v482
        %v519 = vunpack.c.l.b16 %v483
        %v520 = vunpack.c.l.b16 %v484
        %v521 = vunpack.c.l.b16 %v485
        %v522 = vunpack.c.l.b16 %v486
        %v523 = vunpack.c.l.b16 %v487
        %v524 = vunpack.c.l.b16 %v488
        %v525 = vunpack.c.l.b16 %v489
        %v526 = vpack.c.b16 %v511, %v510
        %v527 = vpack.c.b16 %v513, %v512
        %v528 = vpack.c.b16 %v515, %v514
        %v529 = vpack.c.b16 %v517, %v516
        %v530 = vpack.c.b16 %v519, %v518
        %v531 = vpack.c.b16 %v521, %v520
        %v532 = vpack.c.b16 %v523, %v522
        %v533 = vpack.c.b16 %v525, %v524
        %542 = vmatpush.bf16.msra.mxu0 %v533
        %543 = vmatpush.bf16.msra.mxu0 %v532
        %544 = vmatpush.bf16.msra.mxu0 %v531
        %545 = vmatpush.bf16.msra.mxu0 %v530
        %546 = vmatpush.bf16.msra.mxu0 %v529
        %547 = vmatpush.bf16.msra.mxu0 %v528
        %548 = vmatpush.bf16.msra.mxu0 %v527
        %549 = vmatpush.bf16.msra.mxu0 %v526
        %550 = vmatmul.bf16.gmra.mxu0 %v472
        %v551 = vpop.f32.mrf.mxu0
        %v552 = vadd.f32 %v492, %v551
        %v553 = vpop.f32.mrf.mxu0
        %v554 = vadd.f32 %v492, %v553
        %555 = vmatmul.bf16.gmra.mxu0 %v473
        %v556 = vpop.f32.mrf.mxu0
        %v557 = vadd.f32 %v492, %v556
        %v558 = vpop.f32.mrf.mxu0
        %v559 = vadd.f32 %v492, %v558
        %560 = vdwg.mxu0
        %v561 = vmax.f32 %v552, 0.0
        %v562 = vmax.f32 %v554, 0.0
        %v563 = vmax.f32 %v557, 0.0
        %v564 = vmax.f32 %v559, 0.0
        %v565 = vpack.c.bf16 %v562, %v561
        %v566 = vpack.c.bf16 %v564, %v563
        %v567 = vld [vmem:[%s372] sm:$0xf]
        %v568 = vld [vmem:[%s372 + $0x4] sm:$0xf]
        %v569 = vld [vmem:[%s372 + $0x8] sm:$0xf]
        %v570 = vld [vmem:[%s372 + $0xc] sm:$0xf]
        %v571 = vld [vmem:[%s372 + $0x10] sm:$0xf]
        %v572 = vld [vmem:[%s372 + $0x14] sm:$0xf]
        %v573 = vld [vmem:[%s372 + $0x18] sm:$0xf]
        %v574 = vld [vmem:[%s372 + $0x1c] sm:$0xf]
        %v575 = vld [vmem:[%s372 + $0x20] sm:$0xf]
        %v576 = vld [vmem:[%s372 + $0x24] sm:$0xf]
        %v577 = vld [vmem:[%s372 + $0x28] sm:$0xf]
        %v578 = vld [vmem:[%s372 + $0x2c] sm:$0xf]
        %v579 = vld [vmem:[%s372 + $0x30] sm:$0xf]
        %v580 = vld [vmem:[%s372 + $0x34] sm:$0xf]
        %v581 = vld [vmem:[%s372 + $0x38] sm:$0xf]
        %v582 = vld [vmem:[%s372 + $0x3c] sm:$0xf]
        %v583 = vld [vmem:[%s382] sm:$0x1]
        %v585 = vperm.slane %v583, 0
        %v603 = vunpack.c.l.b16 %v567
        %v604 = vunpack.c.l.b16 %v568
        %v605 = vunpack.c.l.b16 %v569
        %v606 = vunpack.c.l.b16 %v570
        %v607 = vunpack.c.l.b16 %v571
        %v608 = vunpack.c.l.b16 %v572
        %v609 = vunpack.c.l.b16 %v573
        %v610 = vunpack.c.l.b16 %v574
        %v611 = vunpack.c.l.b16 %v575
        %v612 = vunpack.c.l.b16 %v576
        %v613 = vunpack.c.l.b16 %v577
        %v614 = vunpack.c.l.b16 %v578
        %v615 = vunpack.c.l.b16 %v579
        %v616 = vunpack.c.l.b16 %v580
        %v617 = vunpack.c.l.b16 %v581
        %v618 = vunpack.c.l.b16 %v582
        %v619 = vpack.c.b16 %v604, %v603
        %v620 = vpack.c.b16 %v606, %v605
        %v621 = vpack.c.b16 %v608, %v607
        %v622 = vpack.c.b16 %v610, %v609
        %v623 = vpack.c.b16 %v612, %v611
        %v624 = vpack.c.b16 %v614, %v613
        %v625 = vpack.c.b16 %v616, %v615
        %v626 = vpack.c.b16 %v618, %v617
        %635 = vmatpush.bf16.msra.mxu0 %v626
        %636 = vmatpush.bf16.msra.mxu0 %v625
        %637 = vmatpush.bf16.msra.mxu0 %v624
        %638 = vmatpush.bf16.msra.mxu0 %v623
        %639 = vmatpush.bf16.msra.mxu0 %v622
        %640 = vmatpush.bf16.msra.mxu0 %v621
        %641 = vmatpush.bf16.msra.mxu0 %v620
        %642 = vmatpush.bf16.msra.mxu0 %v619
        %643 = vmatmul.bf16.gmra.mxu0 %v565
        %v644 = vpop.f32.mrf.mxu0
        %v645 = vadd.f32 %v585, %v644
        %v646 = vpop.f32.mrf.mxu0
        %v647 = vadd.f32 %v585, %v646
        %648 = vmatmul.bf16.gmra.mxu0 %v566
        %v649 = vpop.f32.mrf.mxu0
        %v650 = vadd.f32 %v585, %v649
        %v651 = vpop.f32.mrf.mxu0
        %v652 = vadd.f32 %v585, %v651
        %653 = vdwg.mxu0
        %v654 = vmul.f32 %v645, 0.1
        %v655 = vmul.f32 %v647, 0.1
        %v656 = vmul.f32 %v650, 0.1
        %v657 = vmul.f32 %v652, 0.1
        %v658 = vadd.f32 %v460, %v654
        %v659 = vadd.f32 %v461, %v655
        %v660 = vadd.f32 %v462, %v656
        %v661 = vadd.f32 %v463, %v657
        %v662 = vsub.f32 1.0, %v468
        %v663 = vmul.f32 %v662, %v460
        %v664 = vmul.f32 %v662, %v461
        %v665 = vmul.f32 %v662, %v462
        %v666 = vmul.f32 %v662, %v463
        %v668 = vperm.slane %v469, 0
        %v670 = vsub.f32 %v668, %v663
        %v671 = vsub.f32 %v668, %v664
        %v672 = vsub.f32 %v668, %v665
        %v673 = vsub.f32 %v668, %v666
        %v674 = vstv %s471
        %v675 = vmul.f32 %v674, %v670
        %v676 = vmul.f32 %v674, %v671
        %v677 = vmul.f32 %v674, %v672
        %v678 = vmul.f32 %v674, %v673
        %v679 = vadd.f32 %v658, %v675
        %v680 = vadd.f32 %v659, %v676
        %v681 = vadd.f32 %v660, %v677
        %v682 = vadd.f32 %v661, %v678
        %v683 = vpack.c.bf16 %v680, %v679
        %v684 = vpack.c.bf16 %v682, %v681
        %s685 = scalar_lea.vmem %s352, 64 [#allocation4]
        %v686 = vld [vmem:[%s685] sm:$0xf]
        %v687 = vld [vmem:[%s685 + $0x4] sm:$0xf]
        %v688 = vld [vmem:[%s685 + $0x8] sm:$0xf]
        %v689 = vld [vmem:[%s685 + $0xc] sm:$0xf]
        %v690 = vld [vmem:[%s685 + $0x10] sm:$0xf]
        %v691 = vld [vmem:[%s685 + $0x14] sm:$0xf]
        %v692 = vld [vmem:[%s685 + $0x18] sm:$0xf]
        %v693 = vld [vmem:[%s685 + $0x1c] sm:$0xf]
        %v694 = vld [vmem:[%s685 + $0x20] sm:$0xf]
        %v695 = vld [vmem:[%s685 + $0x24] sm:$0xf]
        %v696 = vld [vmem:[%s685 + $0x28] sm:$0xf]
        %v697 = vld [vmem:[%s685 + $0x2c] sm:$0xf]
        %v698 = vld [vmem:[%s685 + $0x30] sm:$0xf]
        %v699 = vld [vmem:[%s685 + $0x34] sm:$0xf]
        %v700 = vld [vmem:[%s685 + $0x38] sm:$0xf]
        %v701 = vld [vmem:[%s685 + $0x3c] sm:$0xf]
        %s702 = scalar_lea.vmem %s362, 1 [#allocation6]
        %v703 = vld [vmem:[%s702] sm:$0x1]
        %v705 = vperm.slane %v703, 0
        %v723 = vunpack.c.l.b16 %v686
        %v724 = vunpack.c.l.b16 %v687
        %v725 = vunpack.c.l.b16 %v688
        %v726 = vunpack.c.l.b16 %v689
        %v727 = vunpack.c.l.b16 %v690
        %v728 = vunpack.c.l.b16 %v691
        %v729 = vunpack.c.l.b16 %v692
        %v730 = vunpack.c.l.b16 %v693
        %v731 = vunpack.c.l.b16 %v694
        %v732 = vunpack.c.l.b16 %v695
        %v733 = vunpack.c.l.b16 %v696
        %v734 = vunpack.c.l.b16 %v697
        %v735 = vunpack.c.l.b16 %v698
        %v736 = vunpack.c.l.b16 %v699
        %v737 = vunpack.c.l.b16 %v700
        %v738 = vunpack.c.l.b16 %v701
        %v739 = vpack.c.b16 %v724, %v723
        %v740 = vpack.c.b16 %v726, %v725
        %v741 = vpack.c.b16 %v728, %v727
        %v742 = vpack.c.b16 %v730, %v729
        %v743 = vpack.c.b16 %v732, %v731
        %v744 = vpack.c.b16 %v734, %v733
        %v745 = vpack.c.b16 %v736, %v735
        %v746 = vpack.c.b16 %v738, %v737
        %755 = vmatpush.bf16.msra.mxu0 %v746
        %756 = vmatpush.bf16.msra.mxu0 %v745
        %757 = vmatpush.bf16.msra.mxu0 %v744
        %758 = vmatpush.bf16.msra.mxu0 %v743
        %759 = vmatpush.bf16.msra.mxu0 %v742
        %760 = vmatpush.bf16.msra.mxu0 %v741
        %761 = vmatpush.bf16.msra.mxu0 %v740
        %762 = vmatpush.bf16.msra.mxu0 %v739
        %763 = vmatmul.bf16.gmra.mxu0 %v683
        %v764 = vpop.f32.mrf.mxu0
        %v765 = vadd.f32 %v705, %v764
        %v766 = vpop.f32.mrf.mxu0
        %v767 = vadd.f32 %v705, %v766
        %768 = vmatmul.bf16.gmra.mxu0 %v684
        %v769 = vpop.f32.mrf.mxu0
        %v770 = vadd.f32 %v705, %v769
        %v771 = vpop.f32.mrf.mxu0
        %v772 = vadd.f32 %v705, %v771
        %773 = vdwg.mxu0
        %v774 = vmax.f32 %v765, 0.0
        %v775 = vmax.f32 %v767, 0.0
        %v776 = vmax.f32 %v770, 0.0
        %v777 = vmax.f32 %v772, 0.0
        %v778 = vpack.c.bf16 %v775, %v774
        %v779 = vpack.c.bf16 %v777, %v776
        %s780 = scalar_lea.vmem %s372, 64 [#allocation7]
        %v781 = vld [vmem:[%s780] sm:$0xf]
        %v782 = vld [vmem:[%s780 + $0x4] sm:$0xf]
        %v783 = vld [vmem:[%s780 + $0x8] sm:$0xf]
        %v784 = vld [vmem:[%s780 + $0xc] sm:$0xf]
        %v785 = vld [vmem:[%s780 + $0x10] sm:$0xf]
        %v786 = vld [vmem:[%s780 + $0x14] sm:$0xf]
        %v787 = vld [vmem:[%s780 + $0x18] sm:$0xf]
        %v788 = vld [vmem:[%s780 + $0x1c] sm:$0xf]
        %v789 = vld [vmem:[%s780 + $0x20] sm:$0xf]
        %v790 = vld [vmem:[%s780 + $0x24] sm:$0xf]
        %v791 = vld [vmem:[%s780 + $0x28] sm:$0xf]
        %v792 = vld [vmem:[%s780 + $0x2c] sm:$0xf]
        %v793 = vld [vmem:[%s780 + $0x30] sm:$0xf]
        %v794 = vld [vmem:[%s780 + $0x34] sm:$0xf]
        %v795 = vld [vmem:[%s780 + $0x38] sm:$0xf]
        %v796 = vld [vmem:[%s780 + $0x3c] sm:$0xf]
        %s797 = scalar_lea.vmem %s382, 1 [#allocation9]
        %v798 = vld [vmem:[%s797] sm:$0x1]
        %v800 = vperm.slane %v798, 0
        %v818 = vunpack.c.l.b16 %v781
        %v819 = vunpack.c.l.b16 %v782
        %v820 = vunpack.c.l.b16 %v783
        %v821 = vunpack.c.l.b16 %v784
        %v822 = vunpack.c.l.b16 %v785
        %v823 = vunpack.c.l.b16 %v786
        %v824 = vunpack.c.l.b16 %v787
        %v825 = vunpack.c.l.b16 %v788
        %v826 = vunpack.c.l.b16 %v789
        %v827 = vunpack.c.l.b16 %v790
        %v828 = vunpack.c.l.b16 %v791
        %v829 = vunpack.c.l.b16 %v792
        %v830 = vunpack.c.l.b16 %v793
        %v831 = vunpack.c.l.b16 %v794
        %v832 = vunpack.c.l.b16 %v795
        %v833 = vunpack.c.l.b16 %v796
        %v834 = vpack.c.b16 %v819, %v818
        %v835 = vpack.c.b16 %v821, %v820
        %v836 = vpack.c.b16 %v823, %v822
        %v837 = vpack.c.b16 %v825, %v824
        %v838 = vpack.c.b16 %v827, %v826
        %v839 = vpack.c.b16 %v829, %v828
        %v840 = vpack.c.b16 %v831, %v830
        %v841 = vpack.c.b16 %v833, %v832
        %850 = vmatpush.bf16.msra.mxu0 %v841
        %851 = vmatpush.bf16.msra.mxu0 %v840
        %852 = vmatpush.bf16.msra.mxu0 %v839
        %853 = vmatpush.bf16.msra.mxu0 %v838
        %854 = vmatpush.bf16.msra.mxu0 %v837
        %855 = vmatpush.bf16.msra.mxu0 %v836
        %856 = vmatpush.bf16.msra.mxu0 %v835
        %857 = vmatpush.bf16.msra.mxu0 %v834
        %858 = vmatmul.bf16.gmra.mxu0 %v778
        %v859 = vpop.f32.mrf.mxu0
        %v860 = vadd.f32 %v800, %v859
        %v861 = vpop.f32.mrf.mxu0
        %v862 = vadd.f32 %v800, %v861
        %863 = vmatmul.bf16.gmra.mxu0 %v779
        %v864 = vpop.f32.mrf.mxu0
        %v865 = vadd.f32 %v800, %v864
        %v866 = vpop.f32.mrf.mxu0
        %v867 = vadd.f32 %v800, %v866
        %868 = vdwg.mxu0
        %v869 = vmul.f32 %v860, 0.1
        %v870 = vmul.f32 %v862, 0.1
        %v871 = vmul.f32 %v865, 0.1
        %v872 = vmul.f32 %v867, 0.1
        %v873 = vadd.f32 %v679, %v869
        %v874 = vadd.f32 %v680, %v870
        %v875 = vadd.f32 %v681, %v871
        %v876 = vadd.f32 %v682, %v872
        %v877 = vpack.c.bf16 %v874, %v873
        %v878 = vpack.c.bf16 %v876, %v875
        %s879 = scalar_lea.vmem %s352, 128 [#allocation4]
        %v880 = vld [vmem:[%s879] sm:$0xf]
        %v881 = vld [vmem:[%s879 + $0x4] sm:$0xf]
        %v882 = vld [vmem:[%s879 + $0x8] sm:$0xf]
        %v883 = vld [vmem:[%s879 + $0xc] sm:$0xf]
        %v884 = vld [vmem:[%s879 + $0x10] sm:$0xf]
        %v885 = vld [vmem:[%s879 + $0x14] sm:$0xf]
        %v886 = vld [vmem:[%s879 + $0x18] sm:$0xf]
        %v887 = vld [vmem:[%s879 + $0x1c] sm:$0xf]
        %v888 = vld [vmem:[%s879 + $0x20] sm:$0xf]
        %v889 = vld [vmem:[%s879 + $0x24] sm:$0xf]
        %v890 = vld [vmem:[%s879 + $0x28] sm:$0xf]
        %v891 = vld [vmem:[%s879 + $0x2c] sm:$0xf]
        %v892 = vld [vmem:[%s879 + $0x30] sm:$0xf]
        %v893 = vld [vmem:[%s879 + $0x34] sm:$0xf]
        %v894 = vld [vmem:[%s879 + $0x38] sm:$0xf]
        %v895 = vld [vmem:[%s879 + $0x3c] sm:$0xf]
        %s896 = scalar_lea.vmem %s362, 2 [#allocation6]
        %v897 = vld [vmem:[%s896] sm:$0x1]
        %v899 = vperm.slane %v897, 0
        %v917 = vunpack.c.l.b16 %v880
        %v918 = vunpack.c.l.b16 %v881
        %v919 = vunpack.c.l.b16 %v882
        %v920 = vunpack.c.l.b16 %v883
        %v921 = vunpack.c.l.b16 %v884
        %v922 = vunpack.c.l.b16 %v885
        %v923 = vunpack.c.l.b16 %v886
        %v924 = vunpack.c.l.b16 %v887
        %v925 = vunpack.c.l.b16 %v888
        %v926 = vunpack.c.l.b16 %v889
        %v927 = vunpack.c.l.b16 %v890
        %v928 = vunpack.c.l.b16 %v891
        %v929 = vunpack.c.l.b16 %v892
        %v930 = vunpack.c.l.b16 %v893
        %v931 = vunpack.c.l.b16 %v894
        %v932 = vunpack.c.l.b16 %v895
        %v933 = vpack.c.b16 %v918, %v917
        %v934 = vpack.c.b16 %v920, %v919
        %v935 = vpack.c.b16 %v922, %v921
        %v936 = vpack.c.b16 %v924, %v923
        %v937 = vpack.c.b16 %v926, %v925
        %v938 = vpack.c.b16 %v928, %v927
        %v939 = vpack.c.b16 %v930, %v929
        %v940 = vpack.c.b16 %v932, %v931
        %949 = vmatpush.bf16.msra.mxu0 %v940
        %950 = vmatpush.bf16.msra.mxu0 %v939
        %951 = vmatpush.bf16.msra.mxu0 %v938
        %952 = vmatpush.bf16.msra.mxu0 %v937
        %953 = vmatpush.bf16.msra.mxu0 %v936
        %954 = vmatpush.bf16.msra.mxu0 %v935
        %955 = vmatpush.bf16.msra.mxu0 %v934
        %956 = vmatpush.bf16.msra.mxu0 %v933
        %957 = vmatmul.bf16.gmra.mxu0 %v877
        %v958 = vpop.f32.mrf.mxu0
        %v959 = vadd.f32 %v899, %v958
        %v960 = vpop.f32.mrf.mxu0
        %v961 = vadd.f32 %v899, %v960
        %962 = vmatmul.bf16.gmra.mxu0 %v878
        %v963 = vpop.f32.mrf.mxu0
        %v964 = vadd.f32 %v899, %v963
        %v965 = vpop.f32.mrf.mxu0
        %v966 = vadd.f32 %v899, %v965
        %967 = vdwg.mxu0
        %v968 = vmax.f32 %v959, 0.0
        %v969 = vmax.f32 %v961, 0.0
        %v970 = vmax.f32 %v964, 0.0
        %v971 = vmax.f32 %v966, 0.0
        %v972 = vpack.c.bf16 %v969, %v968
        %v973 = vpack.c.bf16 %v971, %v970
        %s974 = scalar_lea.vmem %s372, 128 [#allocation7]
        %v975 = vld [vmem:[%s974] sm:$0xf]
        %v976 = vld [vmem:[%s974 + $0x4] sm:$0xf]
        %v977 = vld [vmem:[%s974 + $0x8] sm:$0xf]
        %v978 = vld [vmem:[%s974 + $0xc] sm:$0xf]
        %v979 = vld [vmem:[%s974 + $0x10] sm:$0xf]
        %v980 = vld [vmem:[%s974 + $0x14] sm:$0xf]
        %v981 = vld [vmem:[%s974 + $0x18] sm:$0xf]
        %v982 = vld [vmem:[%s974 + $0x1c] sm:$0xf]
        %v983 = vld [vmem:[%s974 + $0x20] sm:$0xf]
        %v984 = vld [vmem:[%s974 + $0x24] sm:$0xf]
        %v985 = vld [vmem:[%s974 + $0x28] sm:$0xf]
        %v986 = vld [vmem:[%s974 + $0x2c] sm:$0xf]
        %v987 = vld [vmem:[%s974 + $0x30] sm:$0xf]
        %v988 = vld [vmem:[%s974 + $0x34] sm:$0xf]
        %v989 = vld [vmem:[%s974 + $0x38] sm:$0xf]
        %v990 = vld [vmem:[%s974 + $0x3c] sm:$0xf]
        %s991 = scalar_lea.vmem %s382, 2 [#allocation9]
        %v992 = vld [vmem:[%s991] sm:$0x1]
        %v994 = vperm.slane %v992, 0
        %v1012 = vunpack.c.l.b16 %v975
        %v1013 = vunpack.c.l.b16 %v976
        %v1014 = vunpack.c.l.b16 %v977
        %v1015 = vunpack.c.l.b16 %v978
        %v1016 = vunpack.c.l.b16 %v979
        %v1017 = vunpack.c.l.b16 %v980
        %v1018 = vunpack.c.l.b16 %v981
        %v1019 = vunpack.c.l.b16 %v982
        %v1020 = vunpack.c.l.b16 %v983
        %v1021 = vunpack.c.l.b16 %v984
        %v1022 = vunpack.c.l.b16 %v985
        %v1023 = vunpack.c.l.b16 %v986
        %v1024 = vunpack.c.l.b16 %v987
        %v1025 = vunpack.c.l.b16 %v988
        %v1026 = vunpack.c.l.b16 %v989
        %v1027 = vunpack.c.l.b16 %v990
        %v1028 = vpack.c.b16 %v1013, %v1012
        %v1029 = vpack.c.b16 %v1015, %v1014
        %v1030 = vpack.c.b16 %v1017, %v1016
        %v1031 = vpack.c.b16 %v1019, %v1018
        %v1032 = vpack.c.b16 %v1021, %v1020
        %v1033 = vpack.c.b16 %v1023, %v1022
        %v1034 = vpack.c.b16 %v1025, %v1024
        %v1035 = vpack.c.b16 %v1027, %v1026
        %1044 = vmatpush.bf16.msra.mxu0 %v1035
        %1045 = vmatpush.bf16.msra.mxu0 %v1034
        %1046 = vmatpush.bf16.msra.mxu0 %v1033
        %1047 = vmatpush.bf16.msra.mxu0 %v1032
        %1048 = vmatpush.bf16.msra.mxu0 %v1031
        %1049 = vmatpush.bf16.msra.mxu0 %v1030
        %1050 = vmatpush.bf16.msra.mxu0 %v1029
        %1051 = vmatpush.bf16.msra.mxu0 %v1028
        %1052 = vmatmul.bf16.gmra.mxu0 %v972
        %v1053 = vpop.f32.mrf.mxu0
        %v1054 = vadd.f32 %v994, %v1053
        %v1055 = vpop.f32.mrf.mxu0
        %v1056 = vadd.f32 %v994, %v1055
        %1057 = vmatmul.bf16.gmra.mxu0 %v973
        %v1058 = vpop.f32.mrf.mxu0
        %v1059 = vadd.f32 %v994, %v1058
        %v1060 = vpop.f32.mrf.mxu0
        %v1061 = vadd.f32 %v994, %v1060
        %1062 = vdwg.mxu0
        %v1063 = vmul.f32 %v1054, 0.1
        %v1064 = vmul.f32 %v1056, 0.1
        %v1065 = vmul.f32 %v1059, 0.1
        %v1066 = vmul.f32 %v1061, 0.1
        %v1067 = vadd.f32 %v873, %v1063
        %v1068 = vadd.f32 %v874, %v1064
        %v1069 = vadd.f32 %v875, %v1065
        %v1070 = vadd.f32 %v876, %v1066
        %v1071 = vpack.c.bf16 %v1068, %v1067
        %v1072 = vpack.c.bf16 %v1070, %v1069
        %s1073 = scalar_lea.vmem %s352, 192 [#allocation4]
        %v1074 = vld [vmem:[%s1073] sm:$0xf]
        %v1075 = vld [vmem:[%s1073 + $0x4] sm:$0xf]
        %v1076 = vld [vmem:[%s1073 + $0x8] sm:$0xf]
        %v1077 = vld [vmem:[%s1073 + $0xc] sm:$0xf]
        %v1078 = vld [vmem:[%s1073 + $0x10] sm:$0xf]
        %v1079 = vld [vmem:[%s1073 + $0x14] sm:$0xf]
        %v1080 = vld [vmem:[%s1073 + $0x18] sm:$0xf]
        %v1081 = vld [vmem:[%s1073 + $0x1c] sm:$0xf]
        %v1082 = vld [vmem:[%s1073 + $0x20] sm:$0xf]
        %v1083 = vld [vmem:[%s1073 + $0x24] sm:$0xf]
        %v1084 = vld [vmem:[%s1073 + $0x28] sm:$0xf]
        %v1085 = vld [vmem:[%s1073 + $0x2c] sm:$0xf]
        %v1086 = vld [vmem:[%s1073 + $0x30] sm:$0xf]
        %v1087 = vld [vmem:[%s1073 + $0x34] sm:$0xf]
        %v1088 = vld [vmem:[%s1073 + $0x38] sm:$0xf]
        %v1089 = vld [vmem:[%s1073 + $0x3c] sm:$0xf]
        %s1090 = scalar_lea.vmem %s362, 3 [#allocation6]
        %v1091 = vld [vmem:[%s1090] sm:$0x1]
        %v1093 = vperm.slane %v1091, 0
        %v1111 = vunpack.c.l.b16 %v1074
        %v1112 = vunpack.c.l.b16 %v1075
        %v1113 = vunpack.c.l.b16 %v1076
        %v1114 = vunpack.c.l.b16 %v1077
        %v1115 = vunpack.c.l.b16 %v1078
        %v1116 = vunpack.c.l.b16 %v1079
        %v1117 = vunpack.c.l.b16 %v1080
        %v1118 = vunpack.c.l.b16 %v1081
        %v1119 = vunpack.c.l.b16 %v1082
        %v1120 = vunpack.c.l.b16 %v1083
        %v1121 = vunpack.c.l.b16 %v1084
        %v1122 = vunpack.c.l.b16 %v1085
        %v1123 = vunpack.c.l.b16 %v1086
        %v1124 = vunpack.c.l.b16 %v1087
        %v1125 = vunpack.c.l.b16 %v1088
        %v1126 = vunpack.c.l.b16 %v1089
        %v1127 = vpack.c.b16 %v1112, %v1111
        %v1128 = vpack.c.b16 %v1114, %v1113
        %v1129 = vpack.c.b16 %v1116, %v1115
        %v1130 = vpack.c.b16 %v1118, %v1117
        %v1131 = vpack.c.b16 %v1120, %v1119
        %v1132 = vpack.c.b16 %v1122, %v1121
        %v1133 = vpack.c.b16 %v1124, %v1123
        %v1134 = vpack.c.b16 %v1126, %v1125
        %1143 = vmatpush.bf16.msra.mxu0 %v1134
        %1144 = vmatpush.bf16.msra.mxu0 %v1133
        %1145 = vmatpush.bf16.msra.mxu0 %v1132
        %1146 = vmatpush.bf16.msra.mxu0 %v1131
        %1147 = vmatpush.bf16.msra.mxu0 %v1130
        %1148 = vmatpush.bf16.msra.mxu0 %v1129
        %1149 = vmatpush.bf16.msra.mxu0 %v1128
        %1150 = vmatpush.bf16.msra.mxu0 %v1127
        %1151 = vmatmul.bf16.gmra.mxu0 %v1071
        %v1152 = vpop.f32.mrf.mxu0
        %v1153 = vadd.f32 %v1093, %v1152
        %v1154 = vpop.f32.mrf.mxu0
        %v1155 = vadd.f32 %v1093, %v1154
        %1156 = vmatmul.bf16.gmra.mxu0 %v1072
        %v1157 = vpop.f32.mrf.mxu0
        %v1158 = vadd.f32 %v1093, %v1157
        %v1159 = vpop.f32.mrf.mxu0
        %v1160 = vadd.f32 %v1093, %v1159
        %1161 = vdwg.mxu0
        %v1162 = vmax.f32 %v1153, 0.0
        %v1163 = vmax.f32 %v1155, 0.0
        %v1164 = vmax.f32 %v1158, 0.0
        %v1165 = vmax.f32 %v1160, 0.0
        %v1166 = vpack.c.bf16 %v1163, %v1162
        %v1167 = vpack.c.bf16 %v1165, %v1164
        %s1168 = scalar_lea.vmem %s372, 192 [#allocation7]
        %v1169 = vld [vmem:[%s1168] sm:$0xf]
        %v1170 = vld [vmem:[%s1168 + $0x4] sm:$0xf]
        %v1171 = vld [vmem:[%s1168 + $0x8] sm:$0xf]
        %v1172 = vld [vmem:[%s1168 + $0xc] sm:$0xf]
        %v1173 = vld [vmem:[%s1168 + $0x10] sm:$0xf]
        %v1174 = vld [vmem:[%s1168 + $0x14] sm:$0xf]
        %v1175 = vld [vmem:[%s1168 + $0x18] sm:$0xf]
        %v1176 = vld [vmem:[%s1168 + $0x1c] sm:$0xf]
        %v1177 = vld [vmem:[%s1168 + $0x20] sm:$0xf]
        %v1178 = vld [vmem:[%s1168 + $0x24] sm:$0xf]
        %v1179 = vld [vmem:[%s1168 + $0x28] sm:$0xf]
        %v1180 = vld [vmem:[%s1168 + $0x2c] sm:$0xf]
        %v1181 = vld [vmem:[%s1168 + $0x30] sm:$0xf]
        %v1182 = vld [vmem:[%s1168 + $0x34] sm:$0xf]
        %v1183 = vld [vmem:[%s1168 + $0x38] sm:$0xf]
        %v1184 = vld [vmem:[%s1168 + $0x3c] sm:$0xf]
        %s1185 = scalar_lea.vmem %s382, 3 [#allocation9]
        %v1186 = vld [vmem:[%s1185] sm:$0x1]
        %v1188 = vperm.slane %v1186, 0
        %v1206 = vunpack.c.l.b16 %v1169
        %v1207 = vunpack.c.l.b16 %v1170
        %v1208 = vunpack.c.l.b16 %v1171
        %v1209 = vunpack.c.l.b16 %v1172
        %v1210 = vunpack.c.l.b16 %v1173
        %v1211 = vunpack.c.l.b16 %v1174
        %v1212 = vunpack.c.l.b16 %v1175
        %v1213 = vunpack.c.l.b16 %v1176
        %v1214 = vunpack.c.l.b16 %v1177
        %v1215 = vunpack.c.l.b16 %v1178
        %v1216 = vunpack.c.l.b16 %v1179
        %v1217 = vunpack.c.l.b16 %v1180
        %v1218 = vunpack.c.l.b16 %v1181
        %v1219 = vunpack.c.l.b16 %v1182
        %v1220 = vunpack.c.l.b16 %v1183
        %v1221 = vunpack.c.l.b16 %v1184
        %v1222 = vpack.c.b16 %v1207, %v1206
        %v1223 = vpack.c.b16 %v1209, %v1208
        %v1224 = vpack.c.b16 %v1211, %v1210
        %v1225 = vpack.c.b16 %v1213, %v1212
        %v1226 = vpack.c.b16 %v1215, %v1214
        %v1227 = vpack.c.b16 %v1217, %v1216
        %v1228 = vpack.c.b16 %v1219, %v1218
        %v1229 = vpack.c.b16 %v1221, %v1220
        %1238 = vmatpush.bf16.msra.mxu0 %v1229
        %1239 = vmatpush.bf16.msra.mxu0 %v1228
        %1240 = vmatpush.bf16.msra.mxu0 %v1227
        %1241 = vmatpush.bf16.msra.mxu0 %v1226
        %1242 = vmatpush.bf16.msra.mxu0 %v1225
        %1243 = vmatpush.bf16.msra.mxu0 %v1224
        %1244 = vmatpush.bf16.msra.mxu0 %v1223
        %1245 = vmatpush.bf16.msra.mxu0 %v1222
        %1246 = vmatmul.bf16.gmra.mxu0 %v1166
        %v1247 = vpop.f32.mrf.mxu0
        %v1248 = vadd.f32 %v1188, %v1247
        %v1249 = vpop.f32.mrf.mxu0
        %v1250 = vadd.f32 %v1188, %v1249
        %1251 = vmatmul.bf16.gmra.mxu0 %v1167
        %v1252 = vpop.f32.mrf.mxu0
        %v1253 = vadd.f32 %v1188, %v1252
        %v1254 = vpop.f32.mrf.mxu0
        %v1255 = vadd.f32 %v1188, %v1254
        %1256 = vdwg.mxu0
        %v1257 = vmul.f32 %v1248, 0.1
        %v1258 = vmul.f32 %v1250, 0.1
        %v1259 = vmul.f32 %v1253, 0.1
        %v1260 = vmul.f32 %v1255, 0.1
        %v1261 = vadd.f32 %v1067, %v1257
        %v1262 = vadd.f32 %v1068, %v1258
        %v1263 = vadd.f32 %v1069, %v1259
        %v1264 = vadd.f32 %v1070, %v1260
        %v1265 = vpack.c.bf16 %v1262, %v1261
        %v1266 = vpack.c.bf16 %v1264, %v1263
        %s1267 = scalar_lea.vmem %s352, 256 [#allocation4]
        %v1268 = vld [vmem:[%s1267] sm:$0xf]
        %v1269 = vld [vmem:[%s1267 + $0x4] sm:$0xf]
        %v1270 = vld [vmem:[%s1267 + $0x8] sm:$0xf]
        %v1271 = vld [vmem:[%s1267 + $0xc] sm:$0xf]
        %v1272 = vld [vmem:[%s1267 + $0x10] sm:$0xf]
        %v1273 = vld [vmem:[%s1267 + $0x14] sm:$0xf]
        %v1274 = vld [vmem:[%s1267 + $0x18] sm:$0xf]
        %v1275 = vld [vmem:[%s1267 + $0x1c] sm:$0xf]
        %v1276 = vld [vmem:[%s1267 + $0x20] sm:$0xf]
        %v1277 = vld [vmem:[%s1267 + $0x24] sm:$0xf]
        %v1278 = vld [vmem:[%s1267 + $0x28] sm:$0xf]
        %v1279 = vld [vmem:[%s1267 + $0x2c] sm:$0xf]
        %v1280 = vld [vmem:[%s1267 + $0x30] sm:$0xf]
        %v1281 = vld [vmem:[%s1267 + $0x34] sm:$0xf]
        %v1282 = vld [vmem:[%s1267 + $0x38] sm:$0xf]
        %v1283 = vld [vmem:[%s1267 + $0x3c] sm:$0xf]
        %s1284 = scalar_lea.vmem %s362, 4 [#allocation6]
        %v1285 = vld [vmem:[%s1284] sm:$0x1]
        %v1287 = vperm.slane %v1285, 0
        %v1305 = vunpack.c.l.b16 %v1268
        %v1306 = vunpack.c.l.b16 %v1269
        %v1307 = vunpack.c.l.b16 %v1270
        %v1308 = vunpack.c.l.b16 %v1271
        %v1309 = vunpack.c.l.b16 %v1272
        %v1310 = vunpack.c.l.b16 %v1273
        %v1311 = vunpack.c.l.b16 %v1274
        %v1312 = vunpack.c.l.b16 %v1275
        %v1313 = vunpack.c.l.b16 %v1276
        %v1314 = vunpack.c.l.b16 %v1277
        %v1315 = vunpack.c.l.b16 %v1278
        %v1316 = vunpack.c.l.b16 %v1279
        %v1317 = vunpack.c.l.b16 %v1280
        %v1318 = vunpack.c.l.b16 %v1281
        %v1319 = vunpack.c.l.b16 %v1282
        %v1320 = vunpack.c.l.b16 %v1283
        %v1321 = vpack.c.b16 %v1306, %v1305
        %v1322 = vpack.c.b16 %v1308, %v1307
        %v1323 = vpack.c.b16 %v1310, %v1309
        %v1324 = vpack.c.b16 %v1312, %v1311
        %v1325 = vpack.c.b16 %v1314, %v1313
        %v1326 = vpack.c.b16 %v1316, %v1315
        %v1327 = vpack.c.b16 %v1318, %v1317
        %v1328 = vpack.c.b16 %v1320, %v1319
        %1337 = vmatpush.bf16.msra.mxu0 %v1328
        %1338 = vmatpush.bf16.msra.mxu0 %v1327
        %1339 = vmatpush.bf16.msra.mxu0 %v1326
        %1340 = vmatpush.bf16.msra.mxu0 %v1325
        %1341 = vmatpush.bf16.msra.mxu0 %v1324
        %1342 = vmatpush.bf16.msra.mxu0 %v1323
        %1343 = vmatpush.bf16.msra.mxu0 %v1322
        %1344 = vmatpush.bf16.msra.mxu0 %v1321
        %1345 = vmatmul.bf16.gmra.mxu0 %v1265
        %v1346 = vpop.f32.mrf.mxu0
        %v1347 = vadd.f32 %v1287, %v1346
        %v1348 = vpop.f32.mrf.mxu0
        %v1349 = vadd.f32 %v1287, %v1348
        %1350 = vmatmul.bf16.gmra.mxu0 %v1266
        %v1351 = vpop.f32.mrf.mxu0
        %v1352 = vadd.f32 %v1287, %v1351
        %v1353 = vpop.f32.mrf.mxu0
        %v1354 = vadd.f32 %v1287, %v1353
        %1355 = vdwg.mxu0
        %v1356 = vmax.f32 %v1347, 0.0
        %v1357 = vmax.f32 %v1349, 0.0
        %v1358 = vmax.f32 %v1352, 0.0
        %v1359 = vmax.f32 %v1354, 0.0
        %v1360 = vpack.c.bf16 %v1357, %v1356
        %v1361 = vpack.c.bf16 %v1359, %v1358
        %s1362 = scalar_lea.vmem %s372, 256 [#allocation7]
        %v1363 = vld [vmem:[%s1362] sm:$0xf]
        %v1364 = vld [vmem:[%s1362 + $0x4] sm:$0xf]
        %v1365 = vld [vmem:[%s1362 + $0x8] sm:$0xf]
        %v1366 = vld [vmem:[%s1362 + $0xc] sm:$0xf]
        %v1367 = vld [vmem:[%s1362 + $0x10] sm:$0xf]
        %v1368 = vld [vmem:[%s1362 + $0x14] sm:$0xf]
        %v1369 = vld [vmem:[%s1362 + $0x18] sm:$0xf]
        %v1370 = vld [vmem:[%s1362 + $0x1c] sm:$0xf]
        %v1371 = vld [vmem:[%s1362 + $0x20] sm:$0xf]
        %v1372 = vld [vmem:[%s1362 + $0x24] sm:$0xf]
        %v1373 = vld [vmem:[%s1362 + $0x28] sm:$0xf]
        %v1374 = vld [vmem:[%s1362 + $0x2c] sm:$0xf]
        %v1375 = vld [vmem:[%s1362 + $0x30] sm:$0xf]
        %v1376 = vld [vmem:[%s1362 + $0x34] sm:$0xf]
        %v1377 = vld [vmem:[%s1362 + $0x38] sm:$0xf]
        %v1378 = vld [vmem:[%s1362 + $0x3c] sm:$0xf]
        %s1379 = scalar_lea.vmem %s382, 4 [#allocation9]
        %v1380 = vld [vmem:[%s1379] sm:$0x1]
        %v1382 = vperm.slane %v1380, 0
        %v1400 = vunpack.c.l.b16 %v1363
        %v1401 = vunpack.c.l.b16 %v1364
        %v1402 = vunpack.c.l.b16 %v1365
        %v1403 = vunpack.c.l.b16 %v1366
        %v1404 = vunpack.c.l.b16 %v1367
        %v1405 = vunpack.c.l.b16 %v1368
        %v1406 = vunpack.c.l.b16 %v1369
        %v1407 = vunpack.c.l.b16 %v1370
        %v1408 = vunpack.c.l.b16 %v1371
        %v1409 = vunpack.c.l.b16 %v1372
        %v1410 = vunpack.c.l.b16 %v1373
        %v1411 = vunpack.c.l.b16 %v1374
        %v1412 = vunpack.c.l.b16 %v1375
        %v1413 = vunpack.c.l.b16 %v1376
        %v1414 = vunpack.c.l.b16 %v1377
        %v1415 = vunpack.c.l.b16 %v1378
        %v1416 = vpack.c.b16 %v1401, %v1400
        %v1417 = vpack.c.b16 %v1403, %v1402
        %v1418 = vpack.c.b16 %v1405, %v1404
        %v1419 = vpack.c.b16 %v1407, %v1406
        %v1420 = vpack.c.b16 %v1409, %v1408
        %v1421 = vpack.c.b16 %v1411, %v1410
        %v1422 = vpack.c.b16 %v1413, %v1412
        %v1423 = vpack.c.b16 %v1415, %v1414
        %1432 = vmatpush.bf16.msra.mxu0 %v1423
        %1433 = vmatpush.bf16.msra.mxu0 %v1422
        %1434 = vmatpush.bf16.msra.mxu0 %v1421
        %1435 = vmatpush.bf16.msra.mxu0 %v1420
        %1436 = vmatpush.bf16.msra.mxu0 %v1419
        %1437 = vmatpush.bf16.msra.mxu0 %v1418
        %1438 = vmatpush.bf16.msra.mxu0 %v1417
        %1439 = vmatpush.bf16.msra.mxu0 %v1416
        %1440 = vmatmul.bf16.gmra.mxu0 %v1360
        %v1441 = vpop.f32.mrf.mxu0
        %v1442 = vadd.f32 %v1382, %v1441
        %v1443 = vpop.f32.mrf.mxu0
        %v1444 = vadd.f32 %v1382, %v1443
        %1445 = vmatmul.bf16.gmra.mxu0 %v1361
        %v1446 = vpop.f32.mrf.mxu0
        %v1447 = vadd.f32 %v1382, %v1446
        %v1448 = vpop.f32.mrf.mxu0
        %v1449 = vadd.f32 %v1382, %v1448
        %1450 = vdwg.mxu0
        %v1451 = vmul.f32 %v1442, 0.1
        %v1452 = vmul.f32 %v1444, 0.1
        %v1453 = vmul.f32 %v1447, 0.1
        %v1454 = vmul.f32 %v1449, 0.1
        %v1455 = vadd.f32 %v1261, %v1451
        %v1456 = vadd.f32 %v1262, %v1452
        %v1457 = vadd.f32 %v1263, %v1453
        %v1458 = vadd.f32 %v1264, %v1454
        %v1459 = vpack.c.bf16 %v1456, %v1455
        %v1460 = vpack.c.bf16 %v1458, %v1457
        %s1461 = scalar_lea.vmem %s352, 320 [#allocation4]
        %v1462 = vld [vmem:[%s1461] sm:$0xf]
        %v1463 = vld [vmem:[%s1461 + $0x4] sm:$0xf]
        %v1464 = vld [vmem:[%s1461 + $0x8] sm:$0xf]
        %v1465 = vld [vmem:[%s1461 + $0xc] sm:$0xf]
        %v1466 = vld [vmem:[%s1461 + $0x10] sm:$0xf]
        %v1467 = vld [vmem:[%s1461 + $0x14] sm:$0xf]
        %v1468 = vld [vmem:[%s1461 + $0x18] sm:$0xf]
        %v1469 = vld [vmem:[%s1461 + $0x1c] sm:$0xf]
        %v1470 = vld [vmem:[%s1461 + $0x20] sm:$0xf]
        %v1471 = vld [vmem:[%s1461 + $0x24] sm:$0xf]
        %v1472 = vld [vmem:[%s1461 + $0x28] sm:$0xf]
        %v1473 = vld [vmem:[%s1461 + $0x2c] sm:$0xf]
        %v1474 = vld [vmem:[%s1461 + $0x30] sm:$0xf]
        %v1475 = vld [vmem:[%s1461 + $0x34] sm:$0xf]
        %v1476 = vld [vmem:[%s1461 + $0x38] sm:$0xf]
        %v1477 = vld [vmem:[%s1461 + $0x3c] sm:$0xf]
        %s1478 = scalar_lea.vmem %s362, 5 [#allocation6]
        %v1479 = vld [vmem:[%s1478] sm:$0x1]
        %v1481 = vperm.slane %v1479, 0
        %v1499 = vunpack.c.l.b16 %v1462
        %v1500 = vunpack.c.l.b16 %v1463
        %v1501 = vunpack.c.l.b16 %v1464
        %v1502 = vunpack.c.l.b16 %v1465
        %v1503 = vunpack.c.l.b16 %v1466
        %v1504 = vunpack.c.l.b16 %v1467
        %v1505 = vunpack.c.l.b16 %v1468
        %v1506 = vunpack.c.l.b16 %v1469
        %v1507 = vunpack.c.l.b16 %v1470
        %v1508 = vunpack.c.l.b16 %v1471
        %v1509 = vunpack.c.l.b16 %v1472
        %v1510 = vunpack.c.l.b16 %v1473
        %v1511 = vunpack.c.l.b16 %v1474
        %v1512 = vunpack.c.l.b16 %v1475
        %v1513 = vunpack.c.l.b16 %v1476
        %v1514 = vunpack.c.l.b16 %v1477
        %v1515 = vpack.c.b16 %v1500, %v1499
        %v1516 = vpack.c.b16 %v1502, %v1501
        %v1517 = vpack.c.b16 %v1504, %v1503
        %v1518 = vpack.c.b16 %v1506, %v1505
        %v1519 = vpack.c.b16 %v1508, %v1507
        %v1520 = vpack.c.b16 %v1510, %v1509
        %v1521 = vpack.c.b16 %v1512, %v1511
        %v1522 = vpack.c.b16 %v1514, %v1513
        %1531 = vmatpush.bf16.msra.mxu0 %v1522
        %1532 = vmatpush.bf16.msra.mxu0 %v1521
        %1533 = vmatpush.bf16.msra.mxu0 %v1520
        %1534 = vmatpush.bf16.msra.mxu0 %v1519
        %1535 = vmatpush.bf16.msra.mxu0 %v1518
        %1536 = vmatpush.bf16.msra.mxu0 %v1517
        %1537 = vmatpush.bf16.msra.mxu0 %v1516
        %1538 = vmatpush.bf16.msra.mxu0 %v1515
        %1539 = vmatmul.bf16.gmra.mxu0 %v1459
        %v1540 = vpop.f32.mrf.mxu0
        %v1541 = vadd.f32 %v1481, %v1540
        %v1542 = vpop.f32.mrf.mxu0
        %v1543 = vadd.f32 %v1481, %v1542
        %1544 = vmatmul.bf16.gmra.mxu0 %v1460
        %v1545 = vpop.f32.mrf.mxu0
        %v1546 = vadd.f32 %v1481, %v1545
        %v1547 = vpop.f32.mrf.mxu0
        %v1548 = vadd.f32 %v1481, %v1547
        %1549 = vdwg.mxu0
        %v1550 = vmax.f32 %v1541, 0.0
        %v1551 = vmax.f32 %v1543, 0.0
        %v1552 = vmax.f32 %v1546, 0.0
        %v1553 = vmax.f32 %v1548, 0.0
        %v1554 = vpack.c.bf16 %v1551, %v1550
        %v1555 = vpack.c.bf16 %v1553, %v1552
        %s1556 = scalar_lea.vmem %s372, 320 [#allocation7]
        %v1557 = vld [vmem:[%s1556] sm:$0xf]
        %v1558 = vld [vmem:[%s1556 + $0x4] sm:$0xf]
        %v1559 = vld [vmem:[%s1556 + $0x8] sm:$0xf]
        %v1560 = vld [vmem:[%s1556 + $0xc] sm:$0xf]
        %v1561 = vld [vmem:[%s1556 + $0x10] sm:$0xf]
        %v1562 = vld [vmem:[%s1556 + $0x14] sm:$0xf]
        %v1563 = vld [vmem:[%s1556 + $0x18] sm:$0xf]
        %v1564 = vld [vmem:[%s1556 + $0x1c] sm:$0xf]
        %v1565 = vld [vmem:[%s1556 + $0x20] sm:$0xf]
        %v1566 = vld [vmem:[%s1556 + $0x24] sm:$0xf]
        %v1567 = vld [vmem:[%s1556 + $0x28] sm:$0xf]
        %v1568 = vld [vmem:[%s1556 + $0x2c] sm:$0xf]
        %v1569 = vld [vmem:[%s1556 + $0x30] sm:$0xf]
        %v1570 = vld [vmem:[%s1556 + $0x34] sm:$0xf]
        %v1571 = vld [vmem:[%s1556 + $0x38] sm:$0xf]
        %v1572 = vld [vmem:[%s1556 + $0x3c] sm:$0xf]
        %s1573 = scalar_lea.vmem %s382, 5 [#allocation9]
        %v1574 = vld [vmem:[%s1573] sm:$0x1]
        %v1576 = vperm.slane %v1574, 0
        %v1594 = vunpack.c.l.b16 %v1557
        %v1595 = vunpack.c.l.b16 %v1558
        %v1596 = vunpack.c.l.b16 %v1559
        %v1597 = vunpack.c.l.b16 %v1560
        %v1598 = vunpack.c.l.b16 %v1561
        %v1599 = vunpack.c.l.b16 %v1562
        %v1600 = vunpack.c.l.b16 %v1563
        %v1601 = vunpack.c.l.b16 %v1564
        %v1602 = vunpack.c.l.b16 %v1565
        %v1603 = vunpack.c.l.b16 %v1566
        %v1604 = vunpack.c.l.b16 %v1567
        %v1605 = vunpack.c.l.b16 %v1568
        %v1606 = vunpack.c.l.b16 %v1569
        %v1607 = vunpack.c.l.b16 %v1570
        %v1608 = vunpack.c.l.b16 %v1571
        %v1609 = vunpack.c.l.b16 %v1572
        %v1610 = vpack.c.b16 %v1595, %v1594
        %v1611 = vpack.c.b16 %v1597, %v1596
        %v1612 = vpack.c.b16 %v1599, %v1598
        %v1613 = vpack.c.b16 %v1601, %v1600
        %v1614 = vpack.c.b16 %v1603, %v1602
        %v1615 = vpack.c.b16 %v1605, %v1604
        %v1616 = vpack.c.b16 %v1607, %v1606
        %v1617 = vpack.c.b16 %v1609, %v1608
        %1626 = vmatpush.bf16.msra.mxu0 %v1617
        %1627 = vmatpush.bf16.msra.mxu0 %v1616
        %1628 = vmatpush.bf16.msra.mxu0 %v1615
        %1629 = vmatpush.bf16.msra.mxu0 %v1614
        %1630 = vmatpush.bf16.msra.mxu0 %v1613
        %1631 = vmatpush.bf16.msra.mxu0 %v1612
        %1632 = vmatpush.bf16.msra.mxu0 %v1611
        %1633 = vmatpush.bf16.msra.mxu0 %v1610
        %1634 = vmatmul.bf16.gmra.mxu0 %v1554
        %v1635 = vpop.f32.mrf.mxu0
        %v1636 = vadd.f32 %v1576, %v1635
        %v1637 = vpop.f32.mrf.mxu0
        %v1638 = vadd.f32 %v1576, %v1637
        %1639 = vmatmul.bf16.gmra.mxu0 %v1555
        %v1640 = vpop.f32.mrf.mxu0
        %v1641 = vadd.f32 %v1576, %v1640
        %v1642 = vpop.f32.mrf.mxu0
        %v1643 = vadd.f32 %v1576, %v1642
        %1644 = vdwg.mxu0
        %v1645 = vmul.f32 %v1636, 0.1
        %v1646 = vmul.f32 %v1638, 0.1
        %v1647 = vmul.f32 %v1641, 0.1
        %v1648 = vmul.f32 %v1643, 0.1
        %v1649 = vadd.f32 %v1455, %v1645
        %v1650 = vadd.f32 %v1456, %v1646
        %v1651 = vadd.f32 %v1457, %v1647
        %v1652 = vadd.f32 %v1458, %v1648
        %v1653 = vpack.c.bf16 %v1650, %v1649
        %v1654 = vpack.c.bf16 %v1652, %v1651
        %s1655 = scalar_lea.vmem %s352, 384 [#allocation4]
        %v1656 = vld [vmem:[%s1655] sm:$0xf]
        %v1657 = vld [vmem:[%s1655 + $0x4] sm:$0xf]
        %v1658 = vld [vmem:[%s1655 + $0x8] sm:$0xf]
        %v1659 = vld [vmem:[%s1655 + $0xc] sm:$0xf]
        %v1660 = vld [vmem:[%s1655 + $0x10] sm:$0xf]
        %v1661 = vld [vmem:[%s1655 + $0x14] sm:$0xf]
        %v1662 = vld [vmem:[%s1655 + $0x18] sm:$0xf]
        %v1663 = vld [vmem:[%s1655 + $0x1c] sm:$0xf]
        %v1664 = vld [vmem:[%s1655 + $0x20] sm:$0xf]
        %v1665 = vld [vmem:[%s1655 + $0x24] sm:$0xf]
        %v1666 = vld [vmem:[%s1655 + $0x28] sm:$0xf]
        %v1667 = vld [vmem:[%s1655 + $0x2c] sm:$0xf]
        %v1668 = vld [vmem:[%s1655 + $0x30] sm:$0xf]
        %v1669 = vld [vmem:[%s1655 + $0x34] sm:$0xf]
        %v1670 = vld [vmem:[%s1655 + $0x38] sm:$0xf]
        %v1671 = vld [vmem:[%s1655 + $0x3c] sm:$0xf]
        %s1672 = scalar_lea.vmem %s362, 6 [#allocation6]
        %v1673 = vld [vmem:[%s1672] sm:$0x1]
        %v1675 = vperm.slane %v1673, 0
        %v1693 = vunpack.c.l.b16 %v1656
        %v1694 = vunpack.c.l.b16 %v1657
        %v1695 = vunpack.c.l.b16 %v1658
        %v1696 = vunpack.c.l.b16 %v1659
        %v1697 = vunpack.c.l.b16 %v1660
        %v1698 = vunpack.c.l.b16 %v1661
        %v1699 = vunpack.c.l.b16 %v1662
        %v1700 = vunpack.c.l.b16 %v1663
        %v1701 = vunpack.c.l.b16 %v1664
        %v1702 = vunpack.c.l.b16 %v1665
        %v1703 = vunpack.c.l.b16 %v1666
        %v1704 = vunpack.c.l.b16 %v1667
        %v1705 = vunpack.c.l.b16 %v1668
        %v1706 = vunpack.c.l.b16 %v1669
        %v1707 = vunpack.c.l.b16 %v1670
        %v1708 = vunpack.c.l.b16 %v1671
        %v1709 = vpack.c.b16 %v1694, %v1693
        %v1710 = vpack.c.b16 %v1696, %v1695
        %v1711 = vpack.c.b16 %v1698, %v1697
        %v1712 = vpack.c.b16 %v1700, %v1699
        %v1713 = vpack.c.b16 %v1702, %v1701
        %v1714 = vpack.c.b16 %v1704, %v1703
        %v1715 = vpack.c.b16 %v1706, %v1705
        %v1716 = vpack.c.b16 %v1708, %v1707
        %1725 = vmatpush.bf16.msra.mxu0 %v1716
        %1726 = vmatpush.bf16.msra.mxu0 %v1715
        %1727 = vmatpush.bf16.msra.mxu0 %v1714
        %1728 = vmatpush.bf16.msra.mxu0 %v1713
        %1729 = vmatpush.bf16.msra.mxu0 %v1712
        %1730 = vmatpush.bf16.msra.mxu0 %v1711
        %1731 = vmatpush.bf16.msra.mxu0 %v1710
        %1732 = vmatpush.bf16.msra.mxu0 %v1709
        %1733 = vmatmul.bf16.gmra.mxu0 %v1653
        %v1734 = vpop.f32.mrf.mxu0
        %v1735 = vadd.f32 %v1675, %v1734
        %v1736 = vpop.f32.mrf.mxu0
        %v1737 = vadd.f32 %v1675, %v1736
        %1738 = vmatmul.bf16.gmra.mxu0 %v1654
        %v1739 = vpop.f32.mrf.mxu0
        %v1740 = vadd.f32 %v1675, %v1739
        %v1741 = vpop.f32.mrf.mxu0
        %v1742 = vadd.f32 %v1675, %v1741
        %1743 = vdwg.mxu0
        %v1744 = vmax.f32 %v1735, 0.0
        %v1745 = vmax.f32 %v1737, 0.0
        %v1746 = vmax.f32 %v1740, 0.0
        %v1747 = vmax.f32 %v1742, 0.0
        %v1748 = vpack.c.bf16 %v1745, %v1744
        %v1749 = vpack.c.bf16 %v1747, %v1746
        %s1750 = scalar_lea.vmem %s372, 384 [#allocation7]
        %v1751 = vld [vmem:[%s1750] sm:$0xf]
        %v1752 = vld [vmem:[%s1750 + $0x4] sm:$0xf]
        %v1753 = vld [vmem:[%s1750 + $0x8] sm:$0xf]
        %v1754 = vld [vmem:[%s1750 + $0xc] sm:$0xf]
        %v1755 = vld [vmem:[%s1750 + $0x10] sm:$0xf]
        %v1756 = vld [vmem:[%s1750 + $0x14] sm:$0xf]
        %v1757 = vld [vmem:[%s1750 + $0x18] sm:$0xf]
        %v1758 = vld [vmem:[%s1750 + $0x1c] sm:$0xf]
        %v1759 = vld [vmem:[%s1750 + $0x20] sm:$0xf]
        %v1760 = vld [vmem:[%s1750 + $0x24] sm:$0xf]
        %v1761 = vld [vmem:[%s1750 + $0x28] sm:$0xf]
        %v1762 = vld [vmem:[%s1750 + $0x2c] sm:$0xf]
        %v1763 = vld [vmem:[%s1750 + $0x30] sm:$0xf]
        %v1764 = vld [vmem:[%s1750 + $0x34] sm:$0xf]
        %v1765 = vld [vmem:[%s1750 + $0x38] sm:$0xf]
        %v1766 = vld [vmem:[%s1750 + $0x3c] sm:$0xf]
        %s1767 = scalar_lea.vmem %s382, 6 [#allocation9]
        %v1768 = vld [vmem:[%s1767] sm:$0x1]
        %v1770 = vperm.slane %v1768, 0
        %v1788 = vunpack.c.l.b16 %v1751
        %v1789 = vunpack.c.l.b16 %v1752
        %v1790 = vunpack.c.l.b16 %v1753
        %v1791 = vunpack.c.l.b16 %v1754
        %v1792 = vunpack.c.l.b16 %v1755
        %v1793 = vunpack.c.l.b16 %v1756
        %v1794 = vunpack.c.l.b16 %v1757
        %v1795 = vunpack.c.l.b16 %v1758
        %v1796 = vunpack.c.l.b16 %v1759
        %v1797 = vunpack.c.l.b16 %v1760
        %v1798 = vunpack.c.l.b16 %v1761
        %v1799 = vunpack.c.l.b16 %v1762
        %v1800 = vunpack.c.l.b16 %v1763
        %v1801 = vunpack.c.l.b16 %v1764
        %v1802 = vunpack.c.l.b16 %v1765
        %v1803 = vunpack.c.l.b16 %v1766
        %v1804 = vpack.c.b16 %v1789, %v1788
        %v1805 = vpack.c.b16 %v1791, %v1790
        %v1806 = vpack.c.b16 %v1793, %v1792
        %v1807 = vpack.c.b16 %v1795, %v1794
        %v1808 = vpack.c.b16 %v1797, %v1796
        %v1809 = vpack.c.b16 %v1799, %v1798
        %v1810 = vpack.c.b16 %v1801, %v1800
        %v1811 = vpack.c.b16 %v1803, %v1802
        %1820 = vmatpush.bf16.msra.mxu0 %v1811
        %1821 = vmatpush.bf16.msra.mxu0 %v1810
        %1822 = vmatpush.bf16.msra.mxu0 %v1809
        %1823 = vmatpush.bf16.msra.mxu0 %v1808
        %1824 = vmatpush.bf16.msra.mxu0 %v1807
        %1825 = vmatpush.bf16.msra.mxu0 %v1806
        %1826 = vmatpush.bf16.msra.mxu0 %v1805
        %1827 = vmatpush.bf16.msra.mxu0 %v1804
        %1828 = vmatmul.bf16.gmra.mxu0 %v1748
        %v1829 = vpop.f32.mrf.mxu0
        %v1830 = vadd.f32 %v1770, %v1829
        %v1831 = vpop.f32.mrf.mxu0
        %v1832 = vadd.f32 %v1770, %v1831
        %1833 = vmatmul.bf16.gmra.mxu0 %v1749
        %v1834 = vpop.f32.mrf.mxu0
        %v1835 = vadd.f32 %v1770, %v1834
        %v1836 = vpop.f32.mrf.mxu0
        %v1837 = vadd.f32 %v1770, %v1836
        %1838 = vdwg.mxu0
        %v1839 = vmul.f32 %v1830, 0.1
        %v1840 = vmul.f32 %v1832, 0.1
        %v1841 = vmul.f32 %v1835, 0.1
        %v1842 = vmul.f32 %v1837, 0.1
        %v1843 = vadd.f32 %v1649, %v1839
        %v1844 = vadd.f32 %v1650, %v1840
        %v1845 = vadd.f32 %v1651, %v1841
        %v1846 = vadd.f32 %v1652, %v1842
        %v1847 = vpack.c.bf16 %v1844, %v1843
        %v1848 = vpack.c.bf16 %v1846, %v1845
        %s1849 = scalar_lea.vmem %s352, 448 [#allocation4]
        %v1850 = vld [vmem:[%s1849] sm:$0xf]
        %v1851 = vld [vmem:[%s1849 + $0x4] sm:$0xf]
        %v1852 = vld [vmem:[%s1849 + $0x8] sm:$0xf]
        %v1853 = vld [vmem:[%s1849 + $0xc] sm:$0xf]
        %v1854 = vld [vmem:[%s1849 + $0x10] sm:$0xf]
        %v1855 = vld [vmem:[%s1849 + $0x14] sm:$0xf]
        %v1856 = vld [vmem:[%s1849 + $0x18] sm:$0xf]
        %v1857 = vld [vmem:[%s1849 + $0x1c] sm:$0xf]
        %v1858 = vld [vmem:[%s1849 + $0x20] sm:$0xf]
        %v1859 = vld [vmem:[%s1849 + $0x24] sm:$0xf]
        %v1860 = vld [vmem:[%s1849 + $0x28] sm:$0xf]
        %v1861 = vld [vmem:[%s1849 + $0x2c] sm:$0xf]
        %v1862 = vld [vmem:[%s1849 + $0x30] sm:$0xf]
        %v1863 = vld [vmem:[%s1849 + $0x34] sm:$0xf]
        %v1864 = vld [vmem:[%s1849 + $0x38] sm:$0xf]
        %v1865 = vld [vmem:[%s1849 + $0x3c] sm:$0xf]
        %s1866 = scalar_lea.vmem %s362, 7 [#allocation6]
        %v1867 = vld [vmem:[%s1866] sm:$0x1]
        %v1869 = vperm.slane %v1867, 0
        %v1887 = vunpack.c.l.b16 %v1850
        %v1888 = vunpack.c.l.b16 %v1851
        %v1889 = vunpack.c.l.b16 %v1852
        %v1890 = vunpack.c.l.b16 %v1853
        %v1891 = vunpack.c.l.b16 %v1854
        %v1892 = vunpack.c.l.b16 %v1855
        %v1893 = vunpack.c.l.b16 %v1856
        %v1894 = vunpack.c.l.b16 %v1857
        %v1895 = vunpack.c.l.b16 %v1858
        %v1896 = vunpack.c.l.b16 %v1859
        %v1897 = vunpack.c.l.b16 %v1860
        %v1898 = vunpack.c.l.b16 %v1861
        %v1899 = vunpack.c.l.b16 %v1862
        %v1900 = vunpack.c.l.b16 %v1863
        %v1901 = vunpack.c.l.b16 %v1864
        %v1902 = vunpack.c.l.b16 %v1865
        %v1903 = vpack.c.b16 %v1888, %v1887
        %v1904 = vpack.c.b16 %v1890, %v1889
        %v1905 = vpack.c.b16 %v1892, %v1891
        %v1906 = vpack.c.b16 %v1894, %v1893
        %v1907 = vpack.c.b16 %v1896, %v1895
        %v1908 = vpack.c.b16 %v1898, %v1897
        %v1909 = vpack.c.b16 %v1900, %v1899
        %v1910 = vpack.c.b16 %v1902, %v1901
        %1919 = vmatpush.bf16.msra.mxu0 %v1910
        %1920 = vmatpush.bf16.msra.mxu0 %v1909
        %1921 = vmatpush.bf16.msra.mxu0 %v1908
        %1922 = vmatpush.bf16.msra.mxu0 %v1907
        %1923 = vmatpush.bf16.msra.mxu0 %v1906
        %1924 = vmatpush.bf16.msra.mxu0 %v1905
        %1925 = vmatpush.bf16.msra.mxu0 %v1904
        %1926 = vmatpush.bf16.msra.mxu0 %v1903
        %1927 = vmatmul.bf16.gmra.mxu0 %v1847
        %v1928 = vpop.f32.mrf.mxu0
        %v1929 = vadd.f32 %v1869, %v1928
        %v1930 = vpop.f32.mrf.mxu0
        %v1931 = vadd.f32 %v1869, %v1930
        %1932 = vmatmul.bf16.gmra.mxu0 %v1848
        %v1933 = vpop.f32.mrf.mxu0
        %v1934 = vadd.f32 %v1869, %v1933
        %v1935 = vpop.f32.mrf.mxu0
        %v1936 = vadd.f32 %v1869, %v1935
        %1937 = vdwg.mxu0
        %v1938 = vmax.f32 %v1929, 0.0
        %v1939 = vmax.f32 %v1931, 0.0
        %v1940 = vmax.f32 %v1934, 0.0
        %v1941 = vmax.f32 %v1936, 0.0
        %v1942 = vpack.c.bf16 %v1939, %v1938
        %v1943 = vpack.c.bf16 %v1941, %v1940
        %s1944 = scalar_lea.vmem %s372, 448 [#allocation7]
        %v1945 = vld [vmem:[%s1944] sm:$0xf]
        %v1946 = vld [vmem:[%s1944 + $0x4] sm:$0xf]
        %v1947 = vld [vmem:[%s1944 + $0x8] sm:$0xf]
        %v1948 = vld [vmem:[%s1944 + $0xc] sm:$0xf]
        %v1949 = vld [vmem:[%s1944 + $0x10] sm:$0xf]
        %v1950 = vld [vmem:[%s1944 + $0x14] sm:$0xf]
        %v1951 = vld [vmem:[%s1944 + $0x18] sm:$0xf]
        %v1952 = vld [vmem:[%s1944 + $0x1c] sm:$0xf]
        %v1953 = vld [vmem:[%s1944 + $0x20] sm:$0xf]
        %v1954 = vld [vmem:[%s1944 + $0x24] sm:$0xf]
        %v1955 = vld [vmem:[%s1944 + $0x28] sm:$0xf]
        %v1956 = vld [vmem:[%s1944 + $0x2c] sm:$0xf]
        %v1957 = vld [vmem:[%s1944 + $0x30] sm:$0xf]
        %v1958 = vld [vmem:[%s1944 + $0x34] sm:$0xf]
        %v1959 = vld [vmem:[%s1944 + $0x38] sm:$0xf]
        %v1960 = vld [vmem:[%s1944 + $0x3c] sm:$0xf]
        %s1961 = scalar_lea.vmem %s382, 7 [#allocation9]
        %v1962 = vld [vmem:[%s1961] sm:$0x1]
        %v1964 = vperm.slane %v1962, 0
        %v1982 = vunpack.c.l.b16 %v1945
        %v1983 = vunpack.c.l.b16 %v1946
        %v1984 = vunpack.c.l.b16 %v1947
        %v1985 = vunpack.c.l.b16 %v1948
        %v1986 = vunpack.c.l.b16 %v1949
        %v1987 = vunpack.c.l.b16 %v1950
        %v1988 = vunpack.c.l.b16 %v1951
        %v1989 = vunpack.c.l.b16 %v1952
        %v1990 = vunpack.c.l.b16 %v1953
        %v1991 = vunpack.c.l.b16 %v1954
        %v1992 = vunpack.c.l.b16 %v1955
        %v1993 = vunpack.c.l.b16 %v1956
        %v1994 = vunpack.c.l.b16 %v1957
        %v1995 = vunpack.c.l.b16 %v1958
        %v1996 = vunpack.c.l.b16 %v1959
        %v1997 = vunpack.c.l.b16 %v1960
        %v1998 = vpack.c.b16 %v1983, %v1982
        %v1999 = vpack.c.b16 %v1985, %v1984
        %v2000 = vpack.c.b16 %v1987, %v1986
        %v2001 = vpack.c.b16 %v1989, %v1988
        %v2002 = vpack.c.b16 %v1991, %v1990
        %v2003 = vpack.c.b16 %v1993, %v1992
        %v2004 = vpack.c.b16 %v1995, %v1994
        %v2005 = vpack.c.b16 %v1997, %v1996
        %2014 = vmatpush.bf16.msra.mxu0 %v2005
        %2015 = vmatpush.bf16.msra.mxu0 %v2004
        %2016 = vmatpush.bf16.msra.mxu0 %v2003
        %2017 = vmatpush.bf16.msra.mxu0 %v2002
        %2018 = vmatpush.bf16.msra.mxu0 %v2001
        %2019 = vmatpush.bf16.msra.mxu0 %v2000
        %2020 = vmatpush.bf16.msra.mxu0 %v1999
        %2021 = vmatpush.bf16.msra.mxu0 %v1998
        %2022 = vmatmul.bf16.gmra.mxu0 %v1942
        %v2023 = vpop.f32.mrf.mxu0
        %v2024 = vadd.f32 %v1964, %v2023
        %v2025 = vpop.f32.mrf.mxu0
        %v2026 = vadd.f32 %v1964, %v2025
        %2027 = vmatmul.bf16.gmra.mxu0 %v1943
        %v2028 = vpop.f32.mrf.mxu0
        %v2029 = vadd.f32 %v1964, %v2028
        %v2030 = vpop.f32.mrf.mxu0
        %v2031 = vadd.f32 %v1964, %v2030
        %2032 = vdwg.mxu0
        %v2033 = vmul.f32 %v2024, 0.1
        %v2034 = vmul.f32 %v2026, 0.1
        %v2035 = vmul.f32 %v2029, 0.1
        %v2036 = vmul.f32 %v2031, 0.1
        %v2037 = vadd.f32 %v1843, %v2033
        %v2038 = vadd.f32 %v1844, %v2034
        %v2039 = vadd.f32 %v1845, %v2035
        %v2040 = vadd.f32 %v1846, %v2036
        %v2041 = vpack.c.bf16 %v2038, %v2037
        %v2042 = vpack.c.bf16 %v2040, %v2039
        %s2043 = scalar_lea.vmem %s352, 512 [#allocation4]
        %v2044 = vld [vmem:[%s2043] sm:$0xf]
        %v2045 = vld [vmem:[%s2043 + $0x4] sm:$0xf]
        %v2046 = vld [vmem:[%s2043 + $0x8] sm:$0xf]
        %v2047 = vld [vmem:[%s2043 + $0xc] sm:$0xf]
        %v2048 = vld [vmem:[%s2043 + $0x10] sm:$0xf]
        %v2049 = vld [vmem:[%s2043 + $0x14] sm:$0xf]
        %v2050 = vld [vmem:[%s2043 + $0x18] sm:$0xf]
        %v2051 = vld [vmem:[%s2043 + $0x1c] sm:$0xf]
        %v2052 = vld [vmem:[%s2043 + $0x20] sm:$0xf]
        %v2053 = vld [vmem:[%s2043 + $0x24] sm:$0xf]
        %v2054 = vld [vmem:[%s2043 + $0x28] sm:$0xf]
        %v2055 = vld [vmem:[%s2043 + $0x2c] sm:$0xf]
        %v2056 = vld [vmem:[%s2043 + $0x30] sm:$0xf]
        %v2057 = vld [vmem:[%s2043 + $0x34] sm:$0xf]
        %v2058 = vld [vmem:[%s2043 + $0x38] sm:$0xf]
        %v2059 = vld [vmem:[%s2043 + $0x3c] sm:$0xf]
        %s2060 = scalar_lea.vmem %s362, 8 [#allocation6]
        %v2061 = vld [vmem:[%s2060] sm:$0x1]
        %v2063 = vperm.slane %v2061, 0
        %v2081 = vunpack.c.l.b16 %v2044
        %v2082 = vunpack.c.l.b16 %v2045
        %v2083 = vunpack.c.l.b16 %v2046
        %v2084 = vunpack.c.l.b16 %v2047
        %v2085 = vunpack.c.l.b16 %v2048
        %v2086 = vunpack.c.l.b16 %v2049
        %v2087 = vunpack.c.l.b16 %v2050
        %v2088 = vunpack.c.l.b16 %v2051
        %v2089 = vunpack.c.l.b16 %v2052
        %v2090 = vunpack.c.l.b16 %v2053
        %v2091 = vunpack.c.l.b16 %v2054
        %v2092 = vunpack.c.l.b16 %v2055
        %v2093 = vunpack.c.l.b16 %v2056
        %v2094 = vunpack.c.l.b16 %v2057
        %v2095 = vunpack.c.l.b16 %v2058
        %v2096 = vunpack.c.l.b16 %v2059
        %v2097 = vpack.c.b16 %v2082, %v2081
        %v2098 = vpack.c.b16 %v2084, %v2083
        %v2099 = vpack.c.b16 %v2086, %v2085
        %v2100 = vpack.c.b16 %v2088, %v2087
        %v2101 = vpack.c.b16 %v2090, %v2089
        %v2102 = vpack.c.b16 %v2092, %v2091
        %v2103 = vpack.c.b16 %v2094, %v2093
        %v2104 = vpack.c.b16 %v2096, %v2095
        %2113 = vmatpush.bf16.msra.mxu0 %v2104
        %2114 = vmatpush.bf16.msra.mxu0 %v2103
        %2115 = vmatpush.bf16.msra.mxu0 %v2102
        %2116 = vmatpush.bf16.msra.mxu0 %v2101
        %2117 = vmatpush.bf16.msra.mxu0 %v2100
        %2118 = vmatpush.bf16.msra.mxu0 %v2099
        %2119 = vmatpush.bf16.msra.mxu0 %v2098
        %2120 = vmatpush.bf16.msra.mxu0 %v2097
        %2121 = vmatmul.bf16.gmra.mxu0 %v2041
        %v2122 = vpop.f32.mrf.mxu0
        %v2123 = vadd.f32 %v2063, %v2122
        %v2124 = vpop.f32.mrf.mxu0
        %v2125 = vadd.f32 %v2063, %v2124
        %2126 = vmatmul.bf16.gmra.mxu0 %v2042
        %v2127 = vpop.f32.mrf.mxu0
        %v2128 = vadd.f32 %v2063, %v2127
        %v2129 = vpop.f32.mrf.mxu0
        %v2130 = vadd.f32 %v2063, %v2129
        %2131 = vdwg.mxu0
        %v2132 = vmax.f32 %v2123, 0.0
        %v2133 = vmax.f32 %v2125, 0.0
        %v2134 = vmax.f32 %v2128, 0.0
        %v2135 = vmax.f32 %v2130, 0.0
        %v2136 = vpack.c.bf16 %v2133, %v2132
        %v2137 = vpack.c.bf16 %v2135, %v2134
        %s2138 = scalar_lea.vmem %s372, 512 [#allocation7]
        %v2139 = vld [vmem:[%s2138] sm:$0xf]
        %v2140 = vld [vmem:[%s2138 + $0x4] sm:$0xf]
        %v2141 = vld [vmem:[%s2138 + $0x8] sm:$0xf]
        %v2142 = vld [vmem:[%s2138 + $0xc] sm:$0xf]
        %v2143 = vld [vmem:[%s2138 + $0x10] sm:$0xf]
        %v2144 = vld [vmem:[%s2138 + $0x14] sm:$0xf]
        %v2145 = vld [vmem:[%s2138 + $0x18] sm:$0xf]
        %v2146 = vld [vmem:[%s2138 + $0x1c] sm:$0xf]
        %v2147 = vld [vmem:[%s2138 + $0x20] sm:$0xf]
        %v2148 = vld [vmem:[%s2138 + $0x24] sm:$0xf]
        %v2149 = vld [vmem:[%s2138 + $0x28] sm:$0xf]
        %v2150 = vld [vmem:[%s2138 + $0x2c] sm:$0xf]
        %v2151 = vld [vmem:[%s2138 + $0x30] sm:$0xf]
        %v2152 = vld [vmem:[%s2138 + $0x34] sm:$0xf]
        %v2153 = vld [vmem:[%s2138 + $0x38] sm:$0xf]
        %v2154 = vld [vmem:[%s2138 + $0x3c] sm:$0xf]
        %s2155 = scalar_lea.vmem %s382, 8 [#allocation9]
        %v2156 = vld [vmem:[%s2155] sm:$0x1]
        %v2158 = vperm.slane %v2156, 0
        %v2176 = vunpack.c.l.b16 %v2139
        %v2177 = vunpack.c.l.b16 %v2140
        %v2178 = vunpack.c.l.b16 %v2141
        %v2179 = vunpack.c.l.b16 %v2142
        %v2180 = vunpack.c.l.b16 %v2143
        %v2181 = vunpack.c.l.b16 %v2144
        %v2182 = vunpack.c.l.b16 %v2145
        %v2183 = vunpack.c.l.b16 %v2146
        %v2184 = vunpack.c.l.b16 %v2147
        %v2185 = vunpack.c.l.b16 %v2148
        %v2186 = vunpack.c.l.b16 %v2149
        %v2187 = vunpack.c.l.b16 %v2150
        %v2188 = vunpack.c.l.b16 %v2151
        %v2189 = vunpack.c.l.b16 %v2152
        %v2190 = vunpack.c.l.b16 %v2153
        %v2191 = vunpack.c.l.b16 %v2154
        %v2192 = vpack.c.b16 %v2177, %v2176
        %v2193 = vpack.c.b16 %v2179, %v2178
        %v2194 = vpack.c.b16 %v2181, %v2180
        %v2195 = vpack.c.b16 %v2183, %v2182
        %v2196 = vpack.c.b16 %v2185, %v2184
        %v2197 = vpack.c.b16 %v2187, %v2186
        %v2198 = vpack.c.b16 %v2189, %v2188
        %v2199 = vpack.c.b16 %v2191, %v2190
        %2208 = vmatpush.bf16.msra.mxu0 %v2199
        %2209 = vmatpush.bf16.msra.mxu0 %v2198
        %2210 = vmatpush.bf16.msra.mxu0 %v2197
        %2211 = vmatpush.bf16.msra.mxu0 %v2196
        %2212 = vmatpush.bf16.msra.mxu0 %v2195
        %2213 = vmatpush.bf16.msra.mxu0 %v2194
        %2214 = vmatpush.bf16.msra.mxu0 %v2193
        %2215 = vmatpush.bf16.msra.mxu0 %v2192
        %2216 = vmatmul.bf16.gmra.mxu0 %v2136
        %v2217 = vpop.f32.mrf.mxu0
        %v2218 = vadd.f32 %v2158, %v2217
        %v2219 = vpop.f32.mrf.mxu0
        %v2220 = vadd.f32 %v2158, %v2219
        %2221 = vmatmul.bf16.gmra.mxu0 %v2137
        %v2222 = vpop.f32.mrf.mxu0
        %v2223 = vadd.f32 %v2158, %v2222
        %v2224 = vpop.f32.mrf.mxu0
        %v2225 = vadd.f32 %v2158, %v2224
        %2226 = vdwg.mxu0
        %v2227 = vmul.f32 %v2218, 0.1
        %v2228 = vmul.f32 %v2220, 0.1
        %v2229 = vmul.f32 %v2223, 0.1
        %v2230 = vmul.f32 %v2225, 0.1
        %v2231 = vadd.f32 %v2037, %v2227
        %v2232 = vadd.f32 %v2038, %v2228
        %v2233 = vadd.f32 %v2039, %v2229
        %v2234 = vadd.f32 %v2040, %v2230
        %v2235 = vpack.c.bf16 %v2232, %v2231
        %v2236 = vpack.c.bf16 %v2234, %v2233
        %s2237 = scalar_lea.vmem %s352, 576 [#allocation4]
        %v2238 = vld [vmem:[%s2237] sm:$0xf]
        %v2239 = vld [vmem:[%s2237 + $0x4] sm:$0xf]
        %v2240 = vld [vmem:[%s2237 + $0x8] sm:$0xf]
        %v2241 = vld [vmem:[%s2237 + $0xc] sm:$0xf]
        %v2242 = vld [vmem:[%s2237 + $0x10] sm:$0xf]
        %v2243 = vld [vmem:[%s2237 + $0x14] sm:$0xf]
        %v2244 = vld [vmem:[%s2237 + $0x18] sm:$0xf]
        %v2245 = vld [vmem:[%s2237 + $0x1c] sm:$0xf]
        %v2246 = vld [vmem:[%s2237 + $0x20] sm:$0xf]
        %v2247 = vld [vmem:[%s2237 + $0x24] sm:$0xf]
        %v2248 = vld [vmem:[%s2237 + $0x28] sm:$0xf]
        %v2249 = vld [vmem:[%s2237 + $0x2c] sm:$0xf]
        %v2250 = vld [vmem:[%s2237 + $0x30] sm:$0xf]
        %v2251 = vld [vmem:[%s2237 + $0x34] sm:$0xf]
        %v2252 = vld [vmem:[%s2237 + $0x38] sm:$0xf]
        %v2253 = vld [vmem:[%s2237 + $0x3c] sm:$0xf]
        %s2254 = scalar_lea.vmem %s362, 9 [#allocation6]
        %v2255 = vld [vmem:[%s2254] sm:$0x1]
        %v2257 = vperm.slane %v2255, 0
        %v2275 = vunpack.c.l.b16 %v2238
        %v2276 = vunpack.c.l.b16 %v2239
        %v2277 = vunpack.c.l.b16 %v2240
        %v2278 = vunpack.c.l.b16 %v2241
        %v2279 = vunpack.c.l.b16 %v2242
        %v2280 = vunpack.c.l.b16 %v2243
        %v2281 = vunpack.c.l.b16 %v2244
        %v2282 = vunpack.c.l.b16 %v2245
        %v2283 = vunpack.c.l.b16 %v2246
        %v2284 = vunpack.c.l.b16 %v2247
        %v2285 = vunpack.c.l.b16 %v2248
        %v2286 = vunpack.c.l.b16 %v2249
        %v2287 = vunpack.c.l.b16 %v2250
        %v2288 = vunpack.c.l.b16 %v2251
        %v2289 = vunpack.c.l.b16 %v2252
        %v2290 = vunpack.c.l.b16 %v2253
        %v2291 = vpack.c.b16 %v2276, %v2275
        %v2292 = vpack.c.b16 %v2278, %v2277
        %v2293 = vpack.c.b16 %v2280, %v2279
        %v2294 = vpack.c.b16 %v2282, %v2281
        %v2295 = vpack.c.b16 %v2284, %v2283
        %v2296 = vpack.c.b16 %v2286, %v2285
        %v2297 = vpack.c.b16 %v2288, %v2287
        %v2298 = vpack.c.b16 %v2290, %v2289
        %2307 = vmatpush.bf16.msra.mxu0 %v2298
        %2308 = vmatpush.bf16.msra.mxu0 %v2297
        %2309 = vmatpush.bf16.msra.mxu0 %v2296
        %2310 = vmatpush.bf16.msra.mxu0 %v2295
        %2311 = vmatpush.bf16.msra.mxu0 %v2294
        %2312 = vmatpush.bf16.msra.mxu0 %v2293
        %2313 = vmatpush.bf16.msra.mxu0 %v2292
        %2314 = vmatpush.bf16.msra.mxu0 %v2291
        %2315 = vmatmul.bf16.gmra.mxu0 %v2235
        %v2316 = vpop.f32.mrf.mxu0
        %v2317 = vadd.f32 %v2257, %v2316
        %v2318 = vpop.f32.mrf.mxu0
        %v2319 = vadd.f32 %v2257, %v2318
        %2320 = vmatmul.bf16.gmra.mxu0 %v2236
        %v2321 = vpop.f32.mrf.mxu0
        %v2322 = vadd.f32 %v2257, %v2321
        %v2323 = vpop.f32.mrf.mxu0
        %v2324 = vadd.f32 %v2257, %v2323
        %2325 = vdwg.mxu0
        %v2326 = vmax.f32 %v2317, 0.0
        %v2327 = vmax.f32 %v2319, 0.0
        %v2328 = vmax.f32 %v2322, 0.0
        %v2329 = vmax.f32 %v2324, 0.0
        %v2330 = vpack.c.bf16 %v2327, %v2326
        %v2331 = vpack.c.bf16 %v2329, %v2328
        %s2332 = scalar_lea.vmem %s372, 576 [#allocation7]
        %v2333 = vld [vmem:[%s2332] sm:$0xf]
        %v2334 = vld [vmem:[%s2332 + $0x4] sm:$0xf]
        %v2335 = vld [vmem:[%s2332 + $0x8] sm:$0xf]
        %v2336 = vld [vmem:[%s2332 + $0xc] sm:$0xf]
        %v2337 = vld [vmem:[%s2332 + $0x10] sm:$0xf]
        %v2338 = vld [vmem:[%s2332 + $0x14] sm:$0xf]
        %v2339 = vld [vmem:[%s2332 + $0x18] sm:$0xf]
        %v2340 = vld [vmem:[%s2332 + $0x1c] sm:$0xf]
        %v2341 = vld [vmem:[%s2332 + $0x20] sm:$0xf]
        %v2342 = vld [vmem:[%s2332 + $0x24] sm:$0xf]
        %v2343 = vld [vmem:[%s2332 + $0x28] sm:$0xf]
        %v2344 = vld [vmem:[%s2332 + $0x2c] sm:$0xf]
        %v2345 = vld [vmem:[%s2332 + $0x30] sm:$0xf]
        %v2346 = vld [vmem:[%s2332 + $0x34] sm:$0xf]
        %v2347 = vld [vmem:[%s2332 + $0x38] sm:$0xf]
        %v2348 = vld [vmem:[%s2332 + $0x3c] sm:$0xf]
        %s2349 = scalar_lea.vmem %s382, 9 [#allocation9]
        %v2350 = vld [vmem:[%s2349] sm:$0x1]
        %v2352 = vperm.slane %v2350, 0
        %v2370 = vunpack.c.l.b16 %v2333
        %v2371 = vunpack.c.l.b16 %v2334
        %v2372 = vunpack.c.l.b16 %v2335
        %v2373 = vunpack.c.l.b16 %v2336
        %v2374 = vunpack.c.l.b16 %v2337
        %v2375 = vunpack.c.l.b16 %v2338
        %v2376 = vunpack.c.l.b16 %v2339
        %v2377 = vunpack.c.l.b16 %v2340
        %v2378 = vunpack.c.l.b16 %v2341
        %v2379 = vunpack.c.l.b16 %v2342
        %v2380 = vunpack.c.l.b16 %v2343
        %v2381 = vunpack.c.l.b16 %v2344
        %v2382 = vunpack.c.l.b16 %v2345
        %v2383 = vunpack.c.l.b16 %v2346
        %v2384 = vunpack.c.l.b16 %v2347
        %v2385 = vunpack.c.l.b16 %v2348
        %v2386 = vpack.c.b16 %v2371, %v2370
        %v2387 = vpack.c.b16 %v2373, %v2372
        %v2388 = vpack.c.b16 %v2375, %v2374
        %v2389 = vpack.c.b16 %v2377, %v2376
        %v2390 = vpack.c.b16 %v2379, %v2378
        %v2391 = vpack.c.b16 %v2381, %v2380
        %v2392 = vpack.c.b16 %v2383, %v2382
        %v2393 = vpack.c.b16 %v2385, %v2384
        %2402 = vmatpush.bf16.msra.mxu0 %v2393
        %2403 = vmatpush.bf16.msra.mxu0 %v2392
        %2404 = vmatpush.bf16.msra.mxu0 %v2391
        %2405 = vmatpush.bf16.msra.mxu0 %v2390
        %2406 = vmatpush.bf16.msra.mxu0 %v2389
        %2407 = vmatpush.bf16.msra.mxu0 %v2388
        %2408 = vmatpush.bf16.msra.mxu0 %v2387
        %2409 = vmatpush.bf16.msra.mxu0 %v2386
        %2410 = vmatmul.bf16.gmra.mxu0 %v2330
        %v2411 = vpop.f32.mrf.mxu0
        %v2412 = vadd.f32 %v2352, %v2411
        %v2413 = vpop.f32.mrf.mxu0
        %v2414 = vadd.f32 %v2352, %v2413
        %2415 = vmatmul.bf16.gmra.mxu0 %v2331
        %v2416 = vpop.f32.mrf.mxu0
        %v2417 = vadd.f32 %v2352, %v2416
        %v2418 = vpop.f32.mrf.mxu0
        %v2419 = vadd.f32 %v2352, %v2418
        %2420 = vdwg.mxu0
        %v2421 = vmul.f32 %v2412, 0.1
        %v2422 = vmul.f32 %v2414, 0.1
        %v2423 = vmul.f32 %v2417, 0.1
        %v2424 = vmul.f32 %v2419, 0.1
        %v2425 = vadd.f32 %v2231, %v2421
        %v2426 = vadd.f32 %v2232, %v2422
        %v2427 = vadd.f32 %v2233, %v2423
        %v2428 = vadd.f32 %v2234, %v2424
        %2429 = vst [vmem:[%s446] sm:$0xff] %v2425
        %2430 = vst [vmem:[%s446 + $0x8] sm:$0xff] %v2426
        %2431 = vst [vmem:[%s446 + $0x10] sm:$0xff] %v2427
        %2432 = vst [vmem:[%s446 + $0x18] sm:$0xff] %v2428
        %s2433 = smul.u32 4, %s28
        %p2434 = scmp.lt.s32.totalorder %s2433, 7
        %s2435 = scalar_select %p2434, %s2433, 7
        %s2436 = smul.addr %s2435, 8
        %s2437 = scalar_lea.vmem %s6, %s2436
        // Predicated region
        $region69: #{net_forward.1} parent=43 // pred_check
          %p2438 = pneg %p205
        $region70: #{net_forward.1} parent=43 // pred_check_branch
          %2440 = sbr.rel (%p2438) target = $region72
        $region71: #{net_forward.1} parent=43 // pred_region
          %s2441 = smul.u32 4, %s28
        $region72: #{net_forward.1} parent=43 // pred_fallthru
          _
      $region44: #{net_forward.1} parent=5 // pred_fallthru
        _
      %p2442 = scmp.le.s32.totalorder 2, %s19
      // Predicated region
      $region73: #{net_forward.1} parent=5 // pred_check
        %p2443 = pneg %p2442
      $region74: #{net_forward.1} parent=5 // pred_check_branch
        %2445 = sbr.rel (%p2443) target = $region76
      $region75: #{net_forward.1} parent=5 // pred_region
        %s2446 = ssub.s32 %s19, 2
        // Predicated region
        $region77: #{net_forward.1} parent=75 // pred_check
          %p2447 = pneg %p211
        $region78: #{net_forward.1} parent=75 // pred_check_branch
          %2449 = sbr.rel (%p2447) target = $region80
        $region79: #{net_forward.1} parent=75 // pred_region
          %s2450 = smul.u32 4, %s30
          %p2451 = scmp.lt.s32.totalorder %s2450, 7
          %s2452 = scalar_select %p2451, %s2450, 7
          %s2453 = smul.addr %s2452, 8
          %s2454 = scalar_lea.vmem %s6, %s2453
        $region80: #{net_forward.1} parent=75 // pred_fallthru
          _
      $region76: #{net_forward.1} parent=5 // pred_fallthru
        _
    $region6: #{net_forward.1} parent=1 // loop_footer
      %s23 = sadd.s32 1, %s19
    $region7: #{net_forward.1} parent=1 // loop_footer_branch
      %18 = sbr.rel target = $region3
    $region8: #{net_forward.1} parent=1 // loop_exit
      _
    %2455 = vsyncpa [#allocation3], 1
    %s2456 = scalar_lea.sflag [#allocation3], 1
    %2457 = vsyncpa %s2456, 1
    %2458 = vsyncpa [#allocation5], 1
    %s2459 = scalar_lea.sflag [#allocation5], 1
    %2460 = vsyncpa %s2459, 1
    %2461 = vsyncpa [#allocation8], 1
    %s2462 = scalar_lea.sflag [#allocation8], 1
    %2463 = vsyncpa %s2462, 1

</llo_original>
